<compile_context>
chip_gen: v7x
topology: tpu7x:2x2x1
jax: 0.10.0
libtpu: 0.0.40
codegen_flags: <defaults>
</compile_context>

<pallas_src>
import functools
import math

import jax
import jax.numpy as jnp
from jax import lax
from jax.experimental import pallas as pl
from jax.experimental.pallas import tpu as pltpu

_F32_MIN = float(jnp.finfo(jnp.float32).min)


# ----------------------------------------------------------------------------- glue
def rotary_tables(head_dim, seq_len):
    """LlamaRotaryEmbedding cos/sin tables, shape (seq_len, head_dim)."""
    inv_freq = 1.0 / (10000.0 ** (jnp.arange(0, head_dim, 2, dtype=jnp.float32) / head_dim))
    t = jnp.arange(seq_len, dtype=jnp.float32)
    freqs = t[:, None] * inv_freq[None, :]
    emb = jnp.concatenate([freqs, freqs], axis=-1)
    return jnp.cos(emb), jnp.sin(emb)


def _vmem_limit_bytes():
    # Review item: size the VMEM budget per generation instead of hard-coding 48 MiB.
    try:
        cap = int(pltpu.get_tpu_info().vmem_capacity_bytes)
    except Exception:
        cap = 128 * 1024 * 1024
    return max(32 * 1024 * 1024, min(int(cap * 0.85), 100 * 1024 * 1024))


# ----------------------------------------------------------------------------- kernel
def _libra_layer_kernel(
    x_ref, vmask_ref, cos_ref, sin_ref, ln_w_ref,
    wqkv_ref, wo_ref,
    va_ref, vbq_ref, vbk_ref, vbv_ref, voa_ref, vob_ref,
    wgu_ref, wdown_ref, vgua_ref, vgb_ref, vub_ref, vda_ref, vdb_ref,
    out_ref,
    kh_sc, vh_sc, oacc_sc, voacc_sc,
    *, num_heads, head_dim, kv_tile, eps):
    f32, bf16 = jnp.float32, jnp.bfloat16
    S = x_ref.shape[1]
    H = x_ref.shape[2]
    D = head_dim
    half = D // 2
    R = va_ref.shape[1] // 3            # low-rank width of the vision QKV path
    inter = wgu_ref.shape[1] // 2       # MLP intermediate size
    idr = vgua_ref.shape[1] // 2        # vision MLP low-rank width
    num_kv = S // kv_tile
    scale = 1.0 / math.sqrt(D)

    x = x_ref[0]                        # (S, H) f32 residual stream
    cos_d = cos_ref[0]                  # (S, D) f32
    sin_d = sin_ref[0]                  # (S, D) f32, rotate_half sign already folded in
    vm = vmask_ref[0] > 0.5             # (S, 1) bool, True = vision token

    # Hoisted mask broadcasts (review: JAX does not CSE broadcast_in_dim).
    mask_h = jnp.broadcast_to(vm, (S, H))
    mask_d = jnp.broadcast_to(vm, (S, D))

    def sel_h(vis, lang):               # cal_language_vision (addition_mode=False)
        return jnp.where(mask_h, vis, lang)

    def rms(y, w_row):                  # LlamaRMSNorm, f32 throughout; w_row (1, H)
        var = jnp.mean(y * y, axis=-1, keepdims=True)
        return y * lax.rsqrt(var + eps) * w_row

    def mm(a_bf, w):                    # bf16 MXU matmul, f32 accumulation
        return jnp.dot(a_bf, w, preferred_element_type=f32)

    def rot_half(t):                    # roll-by-half within a head (sign is in sin_d)
        if D % 128 == 0:
            return pltpu.roll(t, shift=half, axis=-1)   # XLU slot at real head_dim
        return jnp.concatenate([t[:, half:], t[:, :half]], axis=-1)

    def rope(t):                        # (S, D) f32
        return t * cos_d + rot_half(t) * sin_d

    # --- input layernorm (language / vision variants, routed per token) --------------
    h = sel_h(rms(x, ln_w_ref[1:2, :]), rms(x, ln_w_ref[0:1, :]))
    h_bf = h.astype(bf16)

    # --- fused low-rank vision "A" projection for q/k/v -------------------------------
    hv = mm(h_bf, va_ref[...])          # (S, 3R) f32
    hv_q = hv[:, 0:R].astype(bf16)
    hv_k = hv[:, R:2 * R].astype(bf16)
    hv_v = hv[:, 2 * R:3 * R].astype(bf16)

    # --- attention: per-head fori_loop with KV-tiled online softmax -------------------
    oacc_sc[...] = jnp.zeros_like(oacc_sc)     # language o_proj accumulator (S, H)
    voacc_sc[...] = jnp.zeros_like(voacc_sc)   # vision o_proj low-rank accum (S, R)
    row_ids = lax.broadcasted_iota(jnp.int32, (S, kv_tile), 0)
    col_base = lax.broadcasted_iota(jnp.int32, (S, kv_tile), 1)

    def head_body(hh, carry):
        # Per-head projections: language path fused (H, 3D), vision path low-rank B.
        qkv_l = mm(h_bf, wqkv_ref[hh])          # (S, 3D) f32
        q_v = mm(hv_q, vbq_ref[hh])             # (S, D)
        k_v = mm(hv_k, vbk_ref[hh])
        v_v = mm(hv_v, vbv_ref[hh])
        q_h = jnp.where(mask_d, q_v, qkv_l[:, 0:D])
        k_h = jnp.where(mask_d, k_v, qkv_l[:, D:2 * D])
        v_h = jnp.where(mask_d, v_v, qkv_l[:, 2 * D:3 * D])

        q_bf = rope(q_h).astype(bf16)           # (S, D)
        kh_sc[...] = rope(k_h).astype(bf16)     # roped K for this head
        vh_sc[...] = v_h.astype(bf16)

        def kv_body(kb, c):                     # online-softmax over KV blocks
            m_p, l_p, acc_p = c
            kv0 = pl.multiple_of(kb * kv_tile, kv_tile)
            k_blk = kh_sc[pl.ds(kv0, kv_tile), :]
            v_blk = vh_sc[pl.ds(kv0, kv_tile), :]
            s = lax.dot_general(q_bf, k_blk, (((1,), (1,)), ((), ())),
                                preferred_element_type=f32) * scale
            allow = (kv0 + col_base) <= row_ids      # causal mask built in-kernel
            s = jnp.where(allow, s, _F32_MIN)
            m_n = jnp.maximum(m_p, jnp.max(s, axis=-1, keepdims=True))
            alpha = jnp.exp(m_p - m_n)
            p = jnp.exp(s - m_n)
            l_n = alpha * l_p + jnp.sum(p, axis=-1, keepdims=True)
            acc_n = alpha * acc_p + jnp.dot(p.astype(bf16), v_blk,
                                            preferred_element_type=f32)
            return m_n, l_n, acc_n

        m0 = jnp.full((S, 1), -jnp.inf, f32)
        l0 = jnp.zeros((S, 1), f32)
        a0 = jnp.zeros((S, D), f32)
        _, l_f, acc_f = lax.fori_loop(0, num_kv, kv_body, (m0, l0, a0))

        o_h = (acc_f * pl.reciprocal(l_f, approx=True)).astype(bf16)   # (S, D)
        # Accumulate this head's contribution to both o_proj paths (no lane concat).
        oacc_sc[...] = oacc_sc[...] + mm(o_h, wo_ref[hh])
        voacc_sc[...] = voacc_sc[...] + mm(o_h, voa_ref[hh])
        return carry

    lax.fori_loop(0, num_heads, head_body, 0)

    o_vis = mm(voacc_sc[...].astype(bf16), vob_ref[...])   # (S, H)
    o = sel_h(o_vis, oacc_sc[...])
    h1 = x + o                                              # first residual (f32)

    # --- post-attention layernorm + dual SwiGLU MLP + second residual ----------------
    g = sel_h(rms(h1, ln_w_ref[3:4, :]), rms(h1, ln_w_ref[2:3, :]))
    g_bf = g.astype(bf16)

    gu = mm(g_bf, wgu_ref[...])                             # (S, 2I) fused gate|up
    act_l = (jax.nn.silu(gu[:, :inter]) * gu[:, inter:]).astype(bf16)
    mlp_l = mm(act_l, wdown_ref[...])

    gu_v = mm(g_bf, vgua_ref[...])                          # (S, 2*idr) fused vision A
    gh = gu_v[:, :idr].astype(bf16)
    uh = gu_v[:, idr:].astype(bf16)
    act_v = (jax.nn.silu(mm(gh, vgb_ref[...])) * mm(uh, vub_ref[...])).astype(bf16)
    mlp_v = mm(mm(act_v, vda_ref[...]).astype(bf16), vdb_ref[...])

    out_ref[0] = h1 + sel_h(mlp_v, mlp_l)


# ----------------------------------------------------------------------------- wrapper
def libra_decoder_layer(x, vision_flag, position_ids, params,
                        *, num_heads, head_dim, eps=1e-6):
    B, S, H = x.shape
    assert H == num_heads * head_dim
    nh, D = num_heads, head_dim
    bf16 = jnp.bfloat16

    # Rotary tables with the rotate_half sign folded into sin (review item).
    cos_t, sin_t = rotary_tables(D, S)
    cos_b = cos_t[position_ids]                       # (B, S, D)
    sin_b = sin_t[position_ids]
    half = D // 2
    sign = jnp.concatenate([-jnp.ones((half,), jnp.float32),
                            jnp.ones((half,), jnp.float32)])
    sin_signed = sin_b * sign

    vmask = vision_flag.astype(jnp.float32)[..., None]   # (B, S, 1)

    # --- host-side weight re-layout (free; lets the kernel use only leading-dim
    #     dynamic indexing per head and wider-N fused matmuls) ---------------------
    wqkv = params["wqkv"]                                            # (3, H, H)
    wqkv_h = (wqkv.reshape(3, H, nh, D).transpose(2, 1, 0, 3)
                  .reshape(nh, H, 3 * D)).astype(bf16)               # (nh, H, 3D)
    wo_h = params["wo"].reshape(nh, D, H).astype(bf16)               # (nh, D, H)
    vqkv_a = params["vqkv_a"]                                        # (3, H, R)
    R = vqkv_a.shape[-1]
    va_f = vqkv_a.transpose(1, 0, 2).reshape(H, 3 * R).astype(bf16)  # (H, 3R)
    vqb = (params["vqkv_b"].reshape(3, R, nh, D)
           .transpose(0, 2, 1, 3)).astype(bf16)                      # (3, nh, R, D)
    vo_a_h = params["vo_a"].reshape(nh, D, R).astype(bf16)           # (nh, D, R)
    vo_b = params["vo_b"].astype(bf16)                               # (R, H)
    w_gu = jnp.concatenate([params["w_gate"], params["w_up"]], axis=1).astype(bf16)
    w_down = params["w_down"].astype(bf16)
    vgu_a = jnp.concatenate([params["vg_a"], params["vu_a"]], axis=1).astype(bf16)
    vg_b = params["vg_b"].astype(bf16)
    vu_b = params["vu_b"].astype(bf16)
    vd_a = params["vd_a"].astype(bf16)
    vd_b = params["vd_b"].astype(bf16)

    kv_tile = min(S, 512)
    if S % kv_tile != 0:
        kv_tile = S   # TODO(synk): ragged final KV block

    inputs = [x, vmask, cos_b, sin_signed, params["ln_w"],
              wqkv_h, wo_h, va_f, vqb[0], vqb[1], vqb[2], vo_a_h, vo_b,
              w_gu, w_down, vgu_a, vg_b, vu_b, vd_a, vd_b]

    def batched_spec(shape):
        nd = len(shape)
        return pl.BlockSpec((1,) + tuple(shape[1:]),
                            lambda b, _n=nd: (b,) + (0,) * (_n - 1))

    def resident_spec(shape):
        # TODO(synk): pipeline_mode=pl.Buffered(1) / HBM streaming at real sizes.
        nd = len(shape)
        return pl.BlockSpec(tuple(shape), lambda b, _n=nd: (0,) * _n)

    in_specs = ([batched_spec(a.shape) for a in inputs[:4]]
                + [resident_spec(a.shape) for a in inputs[4:]])

    kernel = functools.partial(_libra_layer_kernel, num_heads=nh, head_dim=D,
                               kv_tile=kv_tile, eps=eps)

    return pl.pallas_call(
        kernel,
        out_shape=jax.ShapeDtypeStruct((B, S, H), jnp.float32),
        grid_spec=pltpu.PrefetchScalarGridSpec(
            num_scalar_prefetch=0,
            grid=(B,),
            in_specs=in_specs,
            out_specs=batched_spec((B, S, H)),
            scratch_shapes=[
                pltpu.VMEM((S, D), jnp.bfloat16),   # roped K, current head
                pltpu.VMEM((S, D), jnp.bfloat16),   # V, current head
                pltpu.VMEM((S, H), jnp.float32),    # language o_proj accumulator
                pltpu.VMEM((S, R), jnp.float32),    # vision o_proj low-rank accum
            ]),
        compiler_params=pltpu.CompilerParams(
            dimension_semantics=("parallel",),      # megacore / v7x dual TC on batch
            vmem_limit_bytes=_vmem_limit_bytes()),
    )(*inputs)


# ----------------------------------------------------------------------------- params
def init_params(key, H, I, DR):
    ks = jax.random.split(key, 16)

    def w(k, shape, scale=0.05):
        return scale * jax.random.normal(k, shape, jnp.float32)

    # All matmul weights stored as (in, out) == PyTorch weight transposed.
    return dict(
        ln_w=1.0 + 0.1 * jax.random.normal(ks[0], (4, H), jnp.float32),
        wqkv=w(ks[1], (3, H, H)),            # q/k/v_proj
        wo=w(ks[2], (H, H)),                 # o_proj
        vqkv_a=w(ks[3], (3, H, H // DR)),    # vision_{q,k,v}_proj weight_A^T
        vqkv_b=w(ks[4], (3, H // DR, H), 0.2),
        vo_a=w(ks[5], (H, H // DR)),
        vo_b=w(ks[6], (H // DR, H), 0.2),
        w_gate=w(ks[7], (H, I)),
        w_up=w(ks[8], (H, I)),
        w_down=w(ks[9], (I, H)),
        vg_a=w(ks[10], (H, I // DR)),
        vg_b=w(ks[11], (I // DR, I), 0.2),
        vu_a=w(ks[12], (H, I // DR)),
        vu_b=w(ks[13], (I // DR, I), 0.2),
        vd_a=w(ks[14], (I, H // DR)),
        vd_b=w(ks[15], (H // DR, H), 0.2),
    )


# ----------------------------------------------------------------------------- reference
def reference_layer(x, vision_flag, position_ids, P, *, num_heads, head_dim,
                    eps=1e-6, compute_dtype=jnp.bfloat16):
    """Pure-JAX reference with the same mixed-precision policy as the kernel
    (bf16 matmul operands, f32 accumulation, f32 norms/softmax/residuals)."""
    B, S, H = x.shape
    f32 = jnp.float32
    vm = vision_flag[..., None]
    sel = lambda vis, lang: jnp.where(vm, vis, lang)

    def rms(y, w):
        var = jnp.mean(y * y, axis=-1, keepdims=True)
        return y * lax.rsqrt(var + eps) * w

    def lin(a, wt):
        return jnp.dot(a.astype(compute_dtype), wt.astype(compute_dtype),
                       preferred_element_type=f32)

    def llin(a, wa, wb):
        return lin(lin(a, wa), wb)

    h = sel(rms(x, P["ln_w"][1]), rms(x, P["ln_w"][0]))
    q = sel(llin(h, P["vqkv_a"][0], P["vqkv_b"][0]), lin(h, P["wqkv"][0]))
    k = sel(llin(h, P["vqkv_a"][1], P["vqkv_b"][1]), lin(h, P["wqkv"][1]))
    v = sel(llin(h, P["vqkv_a"][2], P["vqkv_b"][2]), lin(h, P["wqkv"][2]))

    to_heads = lambda t: t.reshape(B, S, num_heads, head_dim).transpose(0, 2, 1, 3)
    qh, kh, vh = to_heads(q), to_heads(k), to_heads(v)
    cos_t, sin_t = rotary_tables(head_dim, S)
    cos = cos_t[position_ids][:, None]
    sin = sin_t[position_ids][:, None]
    half = head_dim // 2
    rot_half = lambda t: jnp.concatenate([-t[..., half:], t[..., :half]], axis=-1)
    qh = qh * cos + rot_half(qh) * sin
    kh = kh * cos + rot_half(kh) * sin

    scores = jnp.einsum("bhqd,bhkd->bhqk",
                        qh.astype(compute_dtype), kh.astype(compute_dtype),
                        preferred_element_type=f32) / math.sqrt(head_dim)
    causal = jnp.tril(jnp.ones((S, S), dtype=bool))
    scores = scores + jnp.where(causal, 0.0, _F32_MIN)[None, None]
    scores = jnp.maximum(scores, _F32_MIN)
    probs = jax.nn.softmax(scores, axis=-1)
    ao = jnp.einsum("bhqk,bhkd->bhqd",
                    probs.astype(compute_dtype), vh.astype(compute_dtype),
                    preferred_element_type=f32).transpose(0, 2, 1, 3).reshape(B, S, H)

    o = sel(llin(ao, P["vo_a"], P["vo_b"]), lin(ao, P["wo"]))
    h1 = x + o
    g = sel(rms(h1, P["ln_w"][3]), rms(h1, P["ln_w"][2]))
    mlp_l = lin(jax.nn.silu(lin(g, P["w_gate"])) * lin(g, P["w_up"]), P["w_down"])
    mlp_v = llin(jax.nn.silu(llin(g, P["vg_a"], P["vg_b"]))
                 * llin(g, P["vu_a"], P["vu_b"]),
                 P["vd_a"], P["vd_b"])
    return h1 + sel(mlp_v, mlp_l)


# ----------------------------------------------------------------------------- main
if __name__ == "__main__":
    B, S = 2, 8
    H, NUM_HEADS, HEAD_DIM, INTER, DOWN_RATIO = 32, 4, 8, 64, 4

    key = jax.random.PRNGKey(0)
    kx, kf, kp = jax.random.split(key, 3)

    x = jax.random.normal(kx, (B, S, H), jnp.float32)
    vision_flag = jax.random.uniform(kf, (B, S)) > 0.5          # bool (B, S)
    position_ids = jnp.tile(jnp.arange(S, dtype=jnp.int32)[None], (B, 1))

    params = init_params(kp, H, INTER, DOWN_RATIO)

    out = libra_decoder_layer(x, vision_flag, position_ids, params,
                              num_heads=NUM_HEADS, head_dim=HEAD_DIM)
    out = jax.block_until_ready(out)

    ref = reference_layer(x, vision_flag, position_ids, params,
                          num_heads=NUM_HEADS, head_dim=HEAD_DIM)
    ref = jax.block_until_ready(ref)

    assert out.shape == (B, S, H)
    max_err = float(jnp.max(jnp.abs(out - ref)))
    if max_err < 5e-3:
        print("KERNEL_OK")
    else:
        print(f"MISMATCH max_err={max_err}")
</pallas_src>

<mosaic_0001>
module attributes {stable_mosaic.version = 11 : i64} {
  func.func @_libra_layer_kernel(%arg0: i32, %arg1: memref<1x8x32xf32, #tpu.memory_space<vmem>>, %arg2: memref<1x8x1xf32, #tpu.memory_space<vmem>>, %arg3: memref<1x8x8xf32, #tpu.memory_space<vmem>>, %arg4: memref<1x8x8xf32, #tpu.memory_space<vmem>>, %arg5: memref<4x32xf32, #tpu.memory_space<vmem>>, %arg6: memref<4x32x24xbf16, #tpu.memory_space<vmem>>, %arg7: memref<4x8x32xbf16, #tpu.memory_space<vmem>>, %arg8: memref<32x24xbf16, #tpu.memory_space<vmem>>, %arg9: memref<4x8x8xbf16, #tpu.memory_space<vmem>>, %arg10: memref<4x8x8xbf16, #tpu.memory_space<vmem>>, %arg11: memref<4x8x8xbf16, #tpu.memory_space<vmem>>, %arg12: memref<4x8x8xbf16, #tpu.memory_space<vmem>>, %arg13: memref<8x32xbf16, #tpu.memory_space<vmem>>, %arg14: memref<32x128xbf16, #tpu.memory_space<vmem>>, %arg15: memref<64x32xbf16, #tpu.memory_space<vmem>>, %arg16: memref<32x32xbf16, #tpu.memory_space<vmem>>, %arg17: memref<16x64xbf16, #tpu.memory_space<vmem>>, %arg18: memref<16x64xbf16, #tpu.memory_space<vmem>>, %arg19: memref<64x8xbf16, #tpu.memory_space<vmem>>, %arg20: memref<8x32xbf16, #tpu.memory_space<vmem>>, %arg21: memref<1x8x32xf32, #tpu.memory_space<vmem>>, %arg22: memref<8x8xbf16, #tpu.memory_space<vmem>>, %arg23: memref<8x8xbf16, #tpu.memory_space<vmem>>, %arg24: memref<8x32xf32, #tpu.memory_space<vmem>>, %arg25: memref<8x8xf32, #tpu.memory_space<vmem>>) attributes {dimension_semantics = [#tpu.dimension_semantics<parallel>], iteration_bounds = array<i64: 2>, scalar_prefetch = 0 : i64, scratch_operands = 4 : i64, tpu.core_type = #tpu.core_type<tc>, window_params = [{transform_indices = @transform_0, window_bounds = array<i64: 1, 8, 32>}, {transform_indices = @transform_1, window_bounds = array<i64: 1, 8, 1>}, {transform_indices = @transform_2, window_bounds = array<i64: 1, 8, 8>}, {transform_indices = @transform_3, window_bounds = array<i64: 1, 8, 8>}, {pipeline_mode = #tpu.pipeline_mode<synchronous>, transform_indices = @transform_4, window_bounds = array<i64: 4, 32>}, {pipeline_mode = #tpu.pipeline_mode<synchronous>, transform_indices = @transform_5, window_bounds = array<i64: 4, 32, 24>}, {pipeline_mode = #tpu.pipeline_mode<synchronous>, transform_indices = @transform_6, window_bounds = array<i64: 4, 8, 32>}, {pipeline_mode = #tpu.pipeline_mode<synchronous>, transform_indices = @transform_7, window_bounds = array<i64: 32, 24>}, {pipeline_mode = #tpu.pipeline_mode<synchronous>, transform_indices = @transform_8, window_bounds = array<i64: 4, 8, 8>}, {pipeline_mode = #tpu.pipeline_mode<synchronous>, transform_indices = @transform_9, window_bounds = array<i64: 4, 8, 8>}, {pipeline_mode = #tpu.pipeline_mode<synchronous>, transform_indices = @transform_10, window_bounds = array<i64: 4, 8, 8>}, {pipeline_mode = #tpu.pipeline_mode<synchronous>, transform_indices = @transform_11, window_bounds = array<i64: 4, 8, 8>}, {pipeline_mode = #tpu.pipeline_mode<synchronous>, transform_indices = @transform_12, window_bounds = array<i64: 8, 32>}, {pipeline_mode = #tpu.pipeline_mode<synchronous>, transform_indices = @transform_13, window_bounds = array<i64: 32, 128>}, {pipeline_mode = #tpu.pipeline_mode<synchronous>, transform_indices = @transform_14, window_bounds = array<i64: 64, 32>}, {pipeline_mode = #tpu.pipeline_mode<synchronous>, transform_indices = @transform_15, window_bounds = array<i64: 32, 32>}, {pipeline_mode = #tpu.pipeline_mode<synchronous>, transform_indices = @transform_16, window_bounds = array<i64: 16, 64>}, {pipeline_mode = #tpu.pipeline_mode<synchronous>, transform_indices = @transform_17, window_bounds = array<i64: 16, 64>}, {pipeline_mode = #tpu.pipeline_mode<synchronous>, transform_indices = @transform_18, window_bounds = array<i64: 64, 8>}, {pipeline_mode = #tpu.pipeline_mode<synchronous>, transform_indices = @transform_19, window_bounds = array<i64: 8, 32>}, {transform_indices = @transform_20, window_bounds = array<i64: 1, 8, 32>}]} {
    %c0 = arith.constant 0 : index
    %c0_0 = arith.constant 0 : index
    %c0_1 = arith.constant 0 : index
    %0 = vector.load %arg1[%c0, %c0_0, %c0_1] : memref<1x8x32xf32, #tpu.memory_space<vmem>>, vector<1x8x32xf32>
    %1 = vector.shape_cast %0 : vector<1x8x32xf32> to vector<8x32xf32>
    %c0_2 = arith.constant 0 : index
    %c0_3 = arith.constant 0 : index
    %c0_4 = arith.constant 0 : index
    %2 = vector.load %arg3[%c0_2, %c0_3, %c0_4] : memref<1x8x8xf32, #tpu.memory_space<vmem>>, vector<1x8x8xf32>
    %3 = vector.shape_cast %2 : vector<1x8x8xf32> to vector<8x8xf32>
    %c0_5 = arith.constant 0 : index
    %c0_6 = arith.constant 0 : index
    %c0_7 = arith.constant 0 : index
    %4 = vector.load %arg4[%c0_5, %c0_6, %c0_7] : memref<1x8x8xf32, #tpu.memory_space<vmem>>, vector<1x8x8xf32>
    %5 = vector.shape_cast %4 : vector<1x8x8xf32> to vector<8x8xf32>
    %c0_8 = arith.constant 0 : index
    %c0_9 = arith.constant 0 : index
    %c0_10 = arith.constant 0 : index
    %6 = vector.load %arg2[%c0_8, %c0_9, %c0_10] : memref<1x8x1xf32, #tpu.memory_space<vmem>>, vector<1x8x1xf32>
    %7 = vector.shape_cast %6 : vector<1x8x1xf32> to vector<8x1xf32>
    %cst = arith.constant 5.000000e-01 : f32
    %8 = vector.broadcast %cst : f32 to vector<8x1xf32>
    %9 = arith.cmpf ogt, %7, %8 : vector<8x1xf32>
    %10 = vector.shape_cast %9 : vector<8x1xi1> to vector<8x1xi1>
    %11 = vector.broadcast %10 : vector<8x1xi1> to vector<8x32xi1>
    %12 = vector.shape_cast %9 : vector<8x1xi1> to vector<8x1xi1>
    %13 = vector.broadcast %12 : vector<8x1xi1> to vector<8x8xi1>
    %c1 = arith.constant 1 : index
    %c0_11 = arith.constant 0 : index
    %14 = vector.load %arg5[%c1, %c0_11] : memref<4x32xf32, #tpu.memory_space<vmem>>, vector<1x32xf32>
    %15 = arith.mulf %1, %1 : vector<8x32xf32>
    %cst_12 = arith.constant dense<0.000000e+00> : vector<8xf32>
    %16 = vector.multi_reduction <add>, %15, %cst_12 [1] : vector<8x32xf32> to vector<8xf32>
    %17 = vector.shape_cast %16 : vector<8xf32> to vector<8x1xf32>
    %cst_13 = arith.constant 3.200000e+01 : f32
    %18 = vector.broadcast %cst_13 : f32 to vector<8x1xf32>
    %19 = arith.divf %17, %18 : vector<8x1xf32>
    %cst_14 = arith.constant 9.99999997E-7 : f32
    %20 = vector.broadcast %cst_14 : f32 to vector<8x1xf32>
    %21 = arith.addf %19, %20 : vector<8x1xf32>
    %22 = math.rsqrt %21 : vector<8x1xf32>
    %23 = vector.broadcast %22 : vector<8x1xf32> to vector<8x32xf32>
    %24 = arith.mulf %1, %23 : vector<8x32xf32>
    %25 = vector.broadcast %14 : vector<1x32xf32> to vector<8x32xf32>
    %26 = arith.mulf %24, %25 : vector<8x32xf32>
    %c0_15 = arith.constant 0 : index
    %c0_16 = arith.constant 0 : index
    %27 = vector.load %arg5[%c0_15, %c0_16] : memref<4x32xf32, #tpu.memory_space<vmem>>, vector<1x32xf32>
    %28 = arith.mulf %1, %1 : vector<8x32xf32>
    %cst_17 = arith.constant dense<0.000000e+00> : vector<8xf32>
    %29 = vector.multi_reduction <add>, %28, %cst_17 [1] : vector<8x32xf32> to vector<8xf32>
    %30 = vector.shape_cast %29 : vector<8xf32> to vector<8x1xf32>
    %cst_18 = arith.constant 3.200000e+01 : f32
    %31 = vector.broadcast %cst_18 : f32 to vector<8x1xf32>
    %32 = arith.divf %30, %31 : vector<8x1xf32>
    %cst_19 = arith.constant 9.99999997E-7 : f32
    %33 = vector.broadcast %cst_19 : f32 to vector<8x1xf32>
    %34 = arith.addf %32, %33 : vector<8x1xf32>
    %35 = math.rsqrt %34 : vector<8x1xf32>
    %36 = vector.broadcast %35 : vector<8x1xf32> to vector<8x32xf32>
    %37 = arith.mulf %1, %36 : vector<8x32xf32>
    %38 = vector.broadcast %27 : vector<1x32xf32> to vector<8x32xf32>
    %39 = arith.mulf %37, %38 : vector<8x32xf32>
    %40 = arith.select %11, %26, %39 : vector<8x32xi1>, vector<8x32xf32>
    %41 = arith.truncf %40 : vector<8x32xf32> to vector<8x32xbf16>
    %c0_20 = arith.constant 0 : index
    %c0_21 = arith.constant 0 : index
    %42 = vector.load %arg8[%c0_20, %c0_21] : memref<32x24xbf16, #tpu.memory_space<vmem>>, vector<32x24xbf16>
    %cst_22 = arith.constant dense<0.000000e+00> : vector<8x24xf32>
    %43 = tpu.matmul %41, %42, %cst_22 {dimension_numbers = #tpu.dot_dimension_numbers<[1], [0], [0], [1], [0, 0, 1, 1], [], []>} : vector<8x32xbf16>, vector<32x24xbf16>, vector<8x24xf32> -> vector<8x24xf32>
    %44 = vector.extract_strided_slice %43 {offsets = [0, 0], sizes = [8, 8], strides = [1, 1]} : vector<8x24xf32> to vector<8x8xf32>
    %45 = arith.truncf %44 : vector<8x8xf32> to vector<8x8xbf16>
    %46 = vector.extract_strided_slice %43 {offsets = [0, 8], sizes = [8, 8], strides = [1, 1]} : vector<8x24xf32> to vector<8x8xf32>
    %47 = arith.truncf %46 : vector<8x8xf32> to vector<8x8xbf16>
    %48 = vector.extract_strided_slice %43 {offsets = [0, 16], sizes = [8, 8], strides = [1, 1]} : vector<8x24xf32> to vector<8x8xf32>
    %49 = arith.truncf %48 : vector<8x8xf32> to vector<8x8xbf16>
    %cst_23 = arith.constant 0.000000e+00 : f32
    %50 = vector.broadcast %cst_23 : f32 to vector<8x32xf32>
    %c0_24 = arith.constant 0 : index
    %c0_25 = arith.constant 0 : index
    %51 = vector.load %arg24[%c0_24, %c0_25] : memref<8x32xf32, #tpu.memory_space<vmem>>, vector<8x32xf32>
    tpu.vector_store %arg24[%c0_24, %c0_25], %50 {strides = array<i32>} : memref<8x32xf32, #tpu.memory_space<vmem>>, vector<8x32xf32>,
    %cst_26 = arith.constant 0.000000e+00 : f32
    %52 = vector.broadcast %cst_26 : f32 to vector<8x8xf32>
    %c0_27 = arith.constant 0 : index
    %c0_28 = arith.constant 0 : index
    %53 = vector.load %arg25[%c0_27, %c0_28] : memref<8x8xf32, #tpu.memory_space<vmem>>, vector<8x8xf32>
    tpu.vector_store %arg25[%c0_27, %c0_28], %52 {strides = array<i32>} : memref<8x8xf32, #tpu.memory_space<vmem>>, vector<8x8xf32>,
    %54 = tpu.iota {dimensions = array<i32: 0>} : vector<8x8xi32>
    %55 = tpu.iota {dimensions = array<i32: 1>} : vector<8x8xi32>
    %c0_i32 = arith.constant 0 : i32
    %c4_i32 = arith.constant 4 : i32
    %56 = arith.addi %c0_i32, %c4_i32 : i32
    %c1_i32 = arith.constant 1 : i32
    scf.for %arg26 = %c0_i32 to %56 step %c1_i32  : i32 {
      %134 = arith.index_cast %arg26 : i32 to index
      %c0_71 = arith.constant 0 : index
      %c0_72 = arith.constant 0 : index
      %135 = vector.load %arg6[%134, %c0_71, %c0_72] : memref<4x32x24xbf16, #tpu.memory_space<vmem>>, vector<1x32x24xbf16>
      %136 = vector.shape_cast %135 : vector<1x32x24xbf16> to vector<32x24xbf16>
      %cst_73 = arith.constant dense<0.000000e+00> : vector<8x24xf32>
      %137 = tpu.matmul %41, %136, %cst_73 {dimension_numbers = #tpu.dot_dimension_numbers<[1], [0], [0], [1], [0, 0, 1, 1], [], []>} : vector<8x32xbf16>, vector<32x24xbf16>, vector<8x24xf32> -> vector<8x24xf32>
      %138 = arith.index_cast %arg26 : i32 to index
      %c0_74 = arith.constant 0 : index
      %c0_75 = arith.constant 0 : index
      %139 = vector.load %arg9[%138, %c0_74, %c0_75] : memref<4x8x8xbf16, #tpu.memory_space<vmem>>, vector<1x8x8xbf16>
      %140 = vector.shape_cast %139 : vector<1x8x8xbf16> to vector<8x8xbf16>
      %cst_76 = arith.constant dense<0.000000e+00> : vector<8x8xf32>
      %141 = tpu.matmul %45, %140, %cst_76 {dimension_numbers = #tpu.dot_dimension_numbers<[1], [0], [0], [1], [0, 0, 1, 1], [], []>} : vector<8x8xbf16>, vector<8x8xbf16>, vector<8x8xf32> -> vector<8x8xf32>
      %142 = arith.index_cast %arg26 : i32 to index
      %c0_77 = arith.constant 0 : index
      %c0_78 = arith.constant 0 : index
      %143 = vector.load %arg10[%142, %c0_77, %c0_78] : memref<4x8x8xbf16, #tpu.memory_space<vmem>>, vector<1x8x8xbf16>
      %144 = vector.shape_cast %143 : vector<1x8x8xbf16> to vector<8x8xbf16>
      %cst_79 = arith.constant dense<0.000000e+00> : vector<8x8xf32>
      %145 = tpu.matmul %47, %144, %cst_79 {dimension_numbers = #tpu.dot_dimension_numbers<[1], [0], [0], [1], [0, 0, 1, 1], [], []>} : vector<8x8xbf16>, vector<8x8xbf16>, vector<8x8xf32> -> vector<8x8xf32>
      %146 = arith.index_cast %arg26 : i32 to index
      %c0_80 = arith.constant 0 : index
      %c0_81 = arith.constant 0 : index
      %147 = vector.load %arg11[%146, %c0_80, %c0_81] : memref<4x8x8xbf16, #tpu.memory_space<vmem>>, vector<1x8x8xbf16>
      %148 = vector.shape_cast %147 : vector<1x8x8xbf16> to vector<8x8xbf16>
      %cst_82 = arith.constant dense<0.000000e+00> : vector<8x8xf32>
      %149 = tpu.matmul %49, %148, %cst_82 {dimension_numbers = #tpu.dot_dimension_numbers<[1], [0], [0], [1], [0, 0, 1, 1], [], []>} : vector<8x8xbf16>, vector<8x8xbf16>, vector<8x8xf32> -> vector<8x8xf32>
      %150 = vector.extract_strided_slice %137 {offsets = [0, 0], sizes = [8, 8], strides = [1, 1]} : vector<8x24xf32> to vector<8x8xf32>
      %151 = arith.select %13, %141, %150 : vector<8x8xi1>, vector<8x8xf32>
      %152 = vector.extract_strided_slice %137 {offsets = [0, 8], sizes = [8, 8], strides = [1, 1]} : vector<8x24xf32> to vector<8x8xf32>
      %153 = arith.select %13, %145, %152 : vector<8x8xi1>, vector<8x8xf32>
      %154 = vector.extract_strided_slice %137 {offsets = [0, 16], sizes = [8, 8], strides = [1, 1]} : vector<8x24xf32> to vector<8x8xf32>
      %155 = arith.select %13, %149, %154 : vector<8x8xi1>, vector<8x8xf32>
      %156 = arith.mulf %151, %3 : vector<8x8xf32>
      %157 = vector.extract_strided_slice %151 {offsets = [0, 4], sizes = [8, 4], strides = [1, 1]} : vector<8x8xf32> to vector<8x4xf32>
      %158 = vector.extract_strided_slice %151 {offsets = [0, 0], sizes = [8, 4], strides = [1, 1]} : vector<8x8xf32> to vector<8x4xf32>
      %159 = tpu.concatenate %157, %158 in 1 : vector<8x4xf32>, vector<8x4xf32> -> vector<8x8xf32>
      %160 = arith.mulf %159, %5 : vector<8x8xf32>
      %161 = arith.addf %156, %160 : vector<8x8xf32>
      %162 = arith.truncf %161 : vector<8x8xf32> to vector<8x8xbf16>
      %163 = arith.mulf %153, %3 : vector<8x8xf32>
      %164 = vector.extract_strided_slice %153 {offsets = [0, 4], sizes = [8, 4], strides = [1, 1]} : vector<8x8xf32> to vector<8x4xf32>
      %165 = vector.extract_strided_slice %153 {offsets = [0, 0], sizes = [8, 4], strides = [1, 1]} : vector<8x8xf32> to vector<8x4xf32>
      %166 = tpu.concatenate %164, %165 in 1 : vector<8x4xf32>, vector<8x4xf32> -> vector<8x8xf32>
      %167 = arith.mulf %166, %5 : vector<8x8xf32>
      %168 = arith.addf %163, %167 : vector<8x8xf32>
      %169 = arith.truncf %168 : vector<8x8xf32> to vector<8x8xbf16>
      %c0_83 = arith.constant 0 : index
      %c0_84 = arith.constant 0 : index
      %170 = vector.load %arg22[%c0_83, %c0_84] : memref<8x8xbf16, #tpu.memory_space<vmem>>, vector<8x8xbf16>
      tpu.vector_store %arg22[%c0_83, %c0_84], %169 {strides = array<i32>} : memref<8x8xbf16, #tpu.memory_space<vmem>>, vector<8x8xbf16>,
      %171 = arith.truncf %155 : vector<8x8xf32> to vector<8x8xbf16>
      %c0_85 = arith.constant 0 : index
      %c0_86 = arith.constant 0 : index
      %172 = vector.load %arg23[%c0_85, %c0_86] : memref<8x8xbf16, #tpu.memory_space<vmem>>, vector<8x8xbf16>
      tpu.vector_store %arg23[%c0_85, %c0_86], %171 {strides = array<i32>} : memref<8x8xbf16, #tpu.memory_space<vmem>>, vector<8x8xbf16>,
      %cst_87 = arith.constant 0xFF800000 : f32
      %173 = vector.broadcast %cst_87 : f32 to vector<8x1xf32>
      %cst_88 = arith.constant 0.000000e+00 : f32
      %174 = vector.broadcast %cst_88 : f32 to vector<8x1xf32>
      %cst_89 = arith.constant 0.000000e+00 : f32
      %175 = vector.broadcast %cst_89 : f32 to vector<8x8xf32>
      %c0_i32_90 = arith.constant 0 : i32
      %c8_i32 = arith.constant 8 : i32
      %176 = arith.muli %c0_i32_90, %c8_i32 : i32
      %177 = tpu.assume_multiple %176, 8 : i32
      %178 = arith.index_cast %177 : i32 to index
      %c0_91 = arith.constant 0 : index
      %179 = vector.load %arg22[%178, %c0_91] : memref<8x8xbf16, #tpu.memory_space<vmem>>, vector<8x8xbf16>
      %180 = arith.index_cast %177 : i32 to index
      %c0_92 = arith.constant 0 : index
      %181 = vector.load %arg23[%180, %c0_92] : memref<8x8xbf16, #tpu.memory_space<vmem>>, vector<8x8xbf16>
      %cst_93 = arith.constant dense<0.000000e+00> : vector<8x8xf32>
      %182 = tpu.matmul %162, %179, %cst_93 {dimension_numbers = #tpu.dot_dimension_numbers<[1], [1], [0], [0], [0, 0, 1, 0], [], []>} : vector<8x8xbf16>, vector<8x8xbf16>, vector<8x8xf32> -> vector<8x8xf32>
      %cst_94 = arith.constant 0.353553385 : f32
      %183 = vector.broadcast %cst_94 : f32 to vector<8x8xf32>
      %184 = arith.mulf %182, %183 : vector<8x8xf32>
      %185 = vector.broadcast %177 : i32 to vector<8x8xi32>
      %186 = arith.addi %185, %55 : vector<8x8xi32>
      %187 = arith.cmpi sle, %186, %54 : vector<8x8xi32>
      %cst_95 = arith.constant -3.40282347E+38 : f32
      %188 = vector.broadcast %cst_95 : f32 to vector<8x8xf32>
      %189 = arith.select %187, %184, %188 : vector<8x8xi1>, vector<8x8xf32>
      %cst_96 = arith.constant dense<0xFF800000> : vector<8xf32>
      %190 = vector.multi_reduction <maximumf>, %189, %cst_96 [1] : vector<8x8xf32> to vector<8xf32>
      %191 = vector.shape_cast %190 : vector<8xf32> to vector<8x1xf32>
      %192 = arith.maximumf %173, %191 : vector<8x1xf32>
      %193 = arith.subf %173, %192 : vector<8x1xf32>
      %194 = math.exp %193 : vector<8x1xf32>
      %195 = vector.broadcast %192 : vector<8x1xf32> to vector<8x8xf32>
      %196 = arith.subf %189, %195 : vector<8x8xf32>
      %197 = math.exp %196 : vector<8x8xf32>
      %198 = arith.mulf %194, %174 : vector<8x1xf32>
      %cst_97 = arith.constant dense<0.000000e+00> : vector<8xf32>
      %199 = vector.multi_reduction <add>, %197, %cst_97 [1] : vector<8x8xf32> to vector<8xf32>
      %200 = vector.shape_cast %199 : vector<8xf32> to vector<8x1xf32>
      %201 = arith.addf %198, %200 : vector<8x1xf32>
      %202 = vector.broadcast %194 : vector<8x1xf32> to vector<8x8xf32>
      %203 = arith.mulf %202, %175 : vector<8x8xf32>
      %204 = arith.truncf %197 : vector<8x8xf32> to vector<8x8xbf16>
      %cst_98 = arith.constant dense<0.000000e+00> : vector<8x8xf32>
      %205 = tpu.matmul %204, %181, %cst_98 {dimension_numbers = #tpu.dot_dimension_numbers<[1], [0], [0], [1], [0, 0, 1, 1], [], []>} : vector<8x8xbf16>, vector<8x8xbf16>, vector<8x8xf32> -> vector<8x8xf32>
      %206 = arith.addf %203, %205 : vector<8x8xf32>
      %c1_i32_99 = arith.constant 1 : i32
      %207 = tpu.reciprocal %201 {approx = true} : vector<8x1xf32> -> vector<8x1xf32>
      %208 = vector.broadcast %207 : vector<8x1xf32> to vector<8x8xf32>
      %209 = arith.mulf %206, %208 : vector<8x8xf32>
      %210 = arith.truncf %209 : vector<8x8xf32> to vector<8x8xbf16>
      %c0_100 = arith.constant 0 : index
      %c0_101 = arith.constant 0 : index
      %211 = vector.load %arg24[%c0_100, %c0_101] : memref<8x32xf32, #tpu.memory_space<vmem>>, vector<8x32xf32>
      %212 = arith.index_cast %arg26 : i32 to index
      %c0_102 = arith.constant 0 : index
      %c0_103 = arith.constant 0 : index
      %213 = vector.load %arg7[%212, %c0_102, %c0_103] : memref<4x8x32xbf16, #tpu.memory_space<vmem>>, vector<1x8x32xbf16>
      %214 = vector.shape_cast %213 : vector<1x8x32xbf16> to vector<8x32xbf16>
      %cst_104 = arith.constant dense<0.000000e+00> : vector<8x32xf32>
      %215 = tpu.matmul %210, %214, %cst_104 {dimension_numbers = #tpu.dot_dimension_numbers<[1], [0], [0], [1], [0, 0, 1, 1], [], []>} : vector<8x8xbf16>, vector<8x32xbf16>, vector<8x32xf32> -> vector<8x32xf32>
      %216 = arith.addf %211, %215 : vector<8x32xf32>
      %c0_105 = arith.constant 0 : index
      %c0_106 = arith.constant 0 : index
      %217 = vector.load %arg24[%c0_105, %c0_106] : memref<8x32xf32, #tpu.memory_space<vmem>>, vector<8x32xf32>
      tpu.vector_store %arg24[%c0_105, %c0_106], %216 {strides = array<i32>} : memref<8x32xf32, #tpu.memory_space<vmem>>, vector<8x32xf32>,
      %c0_107 = arith.constant 0 : index
      %c0_108 = arith.constant 0 : index
      %218 = vector.load %arg25[%c0_107, %c0_108] : memref<8x8xf32, #tpu.memory_space<vmem>>, vector<8x8xf32>
      %219 = arith.index_cast %arg26 : i32 to index
      %c0_109 = arith.constant 0 : index
      %c0_110 = arith.constant 0 : index
      %220 = vector.load %arg12[%219, %c0_109, %c0_110] : memref<4x8x8xbf16, #tpu.memory_space<vmem>>, vector<1x8x8xbf16>
      %221 = vector.shape_cast %220 : vector<1x8x8xbf16> to vector<8x8xbf16>
      %cst_111 = arith.constant dense<0.000000e+00> : vector<8x8xf32>
      %222 = tpu.matmul %210, %221, %cst_111 {dimension_numbers = #tpu.dot_dimension_numbers<[1], [0], [0], [1], [0, 0, 1, 1], [], []>} : vector<8x8xbf16>, vector<8x8xbf16>, vector<8x8xf32> -> vector<8x8xf32>
      %223 = arith.addf %218, %222 : vector<8x8xf32>
      %c0_112 = arith.constant 0 : index
      %c0_113 = arith.constant 0 : index
      %224 = vector.load %arg25[%c0_112, %c0_113] : memref<8x8xf32, #tpu.memory_space<vmem>>, vector<8x8xf32>
      tpu.vector_store %arg25[%c0_112, %c0_113], %223 {strides = array<i32>} : memref<8x8xf32, #tpu.memory_space<vmem>>, vector<8x8xf32>,
    }
    %c4_i32_29 = arith.constant 4 : i32
    %c0_30 = arith.constant 0 : index
    %c0_31 = arith.constant 0 : index
    %57 = vector.load %arg25[%c0_30, %c0_31] : memref<8x8xf32, #tpu.memory_space<vmem>>, vector<8x8xf32>
    %58 = arith.truncf %57 : vector<8x8xf32> to vector<8x8xbf16>
    %c0_32 = arith.constant 0 : index
    %c0_33 = arith.constant 0 : index
    %59 = vector.load %arg13[%c0_32, %c0_33] : memref<8x32xbf16, #tpu.memory_space<vmem>>, vector<8x32xbf16>
    %cst_34 = arith.constant dense<0.000000e+00> : vector<8x32xf32>
    %60 = tpu.matmul %58, %59, %cst_34 {dimension_numbers = #tpu.dot_dimension_numbers<[1], [0], [0], [1], [0, 0, 1, 1], [], []>} : vector<8x8xbf16>, vector<8x32xbf16>, vector<8x32xf32> -> vector<8x32xf32>
    %c0_35 = arith.constant 0 : index
    %c0_36 = arith.constant 0 : index
    %61 = vector.load %arg24[%c0_35, %c0_36] : memref<8x32xf32, #tpu.memory_space<vmem>>, vector<8x32xf32>
    %62 = arith.select %11, %60, %61 : vector<8x32xi1>, vector<8x32xf32>
    %63 = arith.addf %1, %62 : vector<8x32xf32>
    %c3 = arith.constant 3 : index
    %c0_37 = arith.constant 0 : index
    %64 = vector.load %arg5[%c3, %c0_37] : memref<4x32xf32, #tpu.memory_space<vmem>>, vector<1x32xf32>
    %65 = arith.mulf %63, %63 : vector<8x32xf32>
    %cst_38 = arith.constant dense<0.000000e+00> : vector<8xf32>
    %66 = vector.multi_reduction <add>, %65, %cst_38 [1] : vector<8x32xf32> to vector<8xf32>
    %67 = vector.shape_cast %66 : vector<8xf32> to vector<8x1xf32>
    %cst_39 = arith.constant 3.200000e+01 : f32
    %68 = vector.broadcast %cst_39 : f32 to vector<8x1xf32>
    %69 = arith.divf %67, %68 : vector<8x1xf32>
    %cst_40 = arith.constant 9.99999997E-7 : f32
    %70 = vector.broadcast %cst_40 : f32 to vector<8x1xf32>
    %71 = arith.addf %69, %70 : vector<8x1xf32>
    %72 = math.rsqrt %71 : vector<8x1xf32>
    %73 = vector.broadcast %72 : vector<8x1xf32> to vector<8x32xf32>
    %74 = arith.mulf %63, %73 : vector<8x32xf32>
    %75 = vector.broadcast %64 : vector<1x32xf32> to vector<8x32xf32>
    %76 = arith.mulf %74, %75 : vector<8x32xf32>
    %c2 = arith.constant 2 : index
    %c0_41 = arith.constant 0 : index
    %77 = vector.load %arg5[%c2, %c0_41] : memref<4x32xf32, #tpu.memory_space<vmem>>, vector<1x32xf32>
    %78 = arith.mulf %63, %63 : vector<8x32xf32>
    %cst_42 = arith.constant dense<0.000000e+00> : vector<8xf32>
    %79 = vector.multi_reduction <add>, %78, %cst_42 [1] : vector<8x32xf32> to vector<8xf32>
    %80 = vector.shape_cast %79 : vector<8xf32> to vector<8x1xf32>
    %cst_43 = arith.constant 3.200000e+01 : f32
    %81 = vector.broadcast %cst_43 : f32 to vector<8x1xf32>
    %82 = arith.divf %80, %81 : vector<8x1xf32>
    %cst_44 = arith.constant 9.99999997E-7 : f32
    %83 = vector.broadcast %cst_44 : f32 to vector<8x1xf32>
    %84 = arith.addf %82, %83 : vector<8x1xf32>
    %85 = math.rsqrt %84 : vector<8x1xf32>
    %86 = vector.broadcast %85 : vector<8x1xf32> to vector<8x32xf32>
    %87 = arith.mulf %63, %86 : vector<8x32xf32>
    %88 = vector.broadcast %77 : vector<1x32xf32> to vector<8x32xf32>
    %89 = arith.mulf %87, %88 : vector<8x32xf32>
    %90 = arith.select %11, %76, %89 : vector<8x32xi1>, vector<8x32xf32>
    %91 = arith.truncf %90 : vector<8x32xf32> to vector<8x32xbf16>
    %c0_45 = arith.constant 0 : index
    %c0_46 = arith.constant 0 : index
    %92 = vector.load %arg14[%c0_45, %c0_46] : memref<32x128xbf16, #tpu.memory_space<vmem>>, vector<32x128xbf16>
    %cst_47 = arith.constant dense<0.000000e+00> : vector<8x128xf32>
    %93 = tpu.matmul %91, %92, %cst_47 {dimension_numbers = #tpu.dot_dimension_numbers<[1], [0], [0], [1], [0, 0, 1, 1], [], []>} : vector<8x32xbf16>, vector<32x128xbf16>, vector<8x128xf32> -> vector<8x128xf32>
    %94 = vector.extract_strided_slice %93 {offsets = [0, 0], sizes = [8, 64], strides = [1, 1]} : vector<8x128xf32> to vector<8x64xf32>
    %95 = arith.negf %94 : vector<8x64xf32>
    %96 = math.exp %95 : vector<8x64xf32>
    %cst_48 = arith.constant 1.000000e+00 : f32
    %97 = vector.broadcast %cst_48 : f32 to vector<8x64xf32>
    %98 = arith.addf %97, %96 : vector<8x64xf32>
    %99 = arith.divf %97, %98 : vector<8x64xf32>
    %100 = arith.mulf %94, %99 : vector<8x64xf32>
    %101 = vector.extract_strided_slice %93 {offsets = [0, 64], sizes = [8, 64], strides = [1, 1]} : vector<8x128xf32> to vector<8x64xf32>
    %102 = arith.mulf %100, %101 : vector<8x64xf32>
    %103 = arith.truncf %102 : vector<8x64xf32> to vector<8x64xbf16>
    %c0_49 = arith.constant 0 : index
    %c0_50 = arith.constant 0 : index
    %104 = vector.load %arg15[%c0_49, %c0_50] : memref<64x32xbf16, #tpu.memory_space<vmem>>, vector<64x32xbf16>
    %cst_51 = arith.constant dense<0.000000e+00> : vector<8x32xf32>
    %105 = tpu.matmul %103, %104, %cst_51 {dimension_numbers = #tpu.dot_dimension_numbers<[1], [0], [0], [1], [0, 0, 1, 1], [], []>} : vector<8x64xbf16>, vector<64x32xbf16>, vector<8x32xf32> -> vector<8x32xf32>
    %c0_52 = arith.constant 0 : index
    %c0_53 = arith.constant 0 : index
    %106 = vector.load %arg16[%c0_52, %c0_53] : memref<32x32xbf16, #tpu.memory_space<vmem>>, vector<32x32xbf16>
    %cst_54 = arith.constant dense<0.000000e+00> : vector<8x32xf32>
    %107 = tpu.matmul %91, %106, %cst_54 {dimension_numbers = #tpu.dot_dimension_numbers<[1], [0], [0], [1], [0, 0, 1, 1], [], []>} : vector<8x32xbf16>, vector<32x32xbf16>, vector<8x32xf32> -> vector<8x32xf32>
    %108 = vector.extract_strided_slice %107 {offsets = [0, 0], sizes = [8, 16], strides = [1, 1]} : vector<8x32xf32> to vector<8x16xf32>
    %109 = arith.truncf %108 : vector<8x16xf32> to vector<8x16xbf16>
    %110 = vector.extract_strided_slice %107 {offsets = [0, 16], sizes = [8, 16], strides = [1, 1]} : vector<8x32xf32> to vector<8x16xf32>
    %111 = arith.truncf %110 : vector<8x16xf32> to vector<8x16xbf16>
    %c0_55 = arith.constant 0 : index
    %c0_56 = arith.constant 0 : index
    %112 = vector.load %arg17[%c0_55, %c0_56] : memref<16x64xbf16, #tpu.memory_space<vmem>>, vector<16x64xbf16>
    %cst_57 = arith.constant dense<0.000000e+00> : vector<8x64xf32>
    %113 = tpu.matmul %109, %112, %cst_57 {dimension_numbers = #tpu.dot_dimension_numbers<[1], [0], [0], [1], [0, 0, 1, 1], [], []>} : vector<8x16xbf16>, vector<16x64xbf16>, vector<8x64xf32> -> vector<8x64xf32>
    %114 = arith.negf %113 : vector<8x64xf32>
    %115 = math.exp %114 : vector<8x64xf32>
    %cst_58 = arith.constant 1.000000e+00 : f32
    %116 = vector.broadcast %cst_58 : f32 to vector<8x64xf32>
    %117 = arith.addf %116, %115 : vector<8x64xf32>
    %118 = arith.divf %116, %117 : vector<8x64xf32>
    %119 = arith.mulf %113, %118 : vector<8x64xf32>
    %c0_59 = arith.constant 0 : index
    %c0_60 = arith.constant 0 : index
    %120 = vector.load %arg18[%c0_59, %c0_60] : memref<16x64xbf16, #tpu.memory_space<vmem>>, vector<16x64xbf16>
    %cst_61 = arith.constant dense<0.000000e+00> : vector<8x64xf32>
    %121 = tpu.matmul %111, %120, %cst_61 {dimension_numbers = #tpu.dot_dimension_numbers<[1], [0], [0], [1], [0, 0, 1, 1], [], []>} : vector<8x16xbf16>, vector<16x64xbf16>, vector<8x64xf32> -> vector<8x64xf32>
    %122 = arith.mulf %119, %121 : vector<8x64xf32>
    %123 = arith.truncf %122 : vector<8x64xf32> to vector<8x64xbf16>
    %c0_62 = arith.constant 0 : index
    %c0_63 = arith.constant 0 : index
    %124 = vector.load %arg19[%c0_62, %c0_63] : memref<64x8xbf16, #tpu.memory_space<vmem>>, vector<64x8xbf16>
    %cst_64 = arith.constant dense<0.000000e+00> : vector<8x8xf32>
    %125 = tpu.matmul %123, %124, %cst_64 {dimension_numbers = #tpu.dot_dimension_numbers<[1], [0], [0], [1], [0, 0, 1, 1], [], []>} : vector<8x64xbf16>, vector<64x8xbf16>, vector<8x8xf32> -> vector<8x8xf32>
    %126 = arith.truncf %125 : vector<8x8xf32> to vector<8x8xbf16>
    %c0_65 = arith.constant 0 : index
    %c0_66 = arith.constant 0 : index
    %127 = vector.load %arg20[%c0_65, %c0_66] : memref<8x32xbf16, #tpu.memory_space<vmem>>, vector<8x32xbf16>
    %cst_67 = arith.constant dense<0.000000e+00> : vector<8x32xf32>
    %128 = tpu.matmul %126, %127, %cst_67 {dimension_numbers = #tpu.dot_dimension_numbers<[1], [0], [0], [1], [0, 0, 1, 1], [], []>} : vector<8x8xbf16>, vector<8x32xbf16>, vector<8x32xf32> -> vector<8x32xf32>
    %129 = arith.select %11, %128, %105 : vector<8x32xi1>, vector<8x32xf32>
    %130 = arith.addf %63, %129 : vector<8x32xf32>
    %c0_68 = arith.constant 0 : index
    %c0_69 = arith.constant 0 : index
    %c0_70 = arith.constant 0 : index
    %131 = vector.load %arg21[%c0_68, %c0_69, %c0_70] : memref<1x8x32xf32, #tpu.memory_space<vmem>>, vector<1x8x32xf32>
    %132 = vector.shape_cast %131 : vector<1x8x32xf32> to vector<8x32xf32>
    %133 = vector.shape_cast %130 : vector<8x32xf32> to vector<1x8x32xf32>
    tpu.vector_store %arg21[%c0_68, %c0_69, %c0_70], %133 {strides = array<i32>} : memref<1x8x32xf32, #tpu.memory_space<vmem>>, vector<1x8x32xf32>,
    return
  }
  func.func @transform_0(%arg0: i32) -> (i32, i32, i32) {
    %c0_i32 = arith.constant 0 : i32
    %c0_i32_0 = arith.constant 0 : i32
    %c0_i32_1 = arith.constant 0 : i32
    return %arg0, %c0_i32, %c0_i32_0 : i32, i32, i32
  }
  func.func @transform_1(%arg0: i32) -> (i32, i32, i32) {
    %c0_i32 = arith.constant 0 : i32
    %c0_i32_0 = arith.constant 0 : i32
    %c0_i32_1 = arith.constant 0 : i32
    return %arg0, %c0_i32, %c0_i32_0 : i32, i32, i32
  }
  func.func @transform_2(%arg0: i32) -> (i32, i32, i32) {
    %c0_i32 = arith.constant 0 : i32
    %c0_i32_0 = arith.constant 0 : i32
    %c0_i32_1 = arith.constant 0 : i32
    return %arg0, %c0_i32, %c0_i32_0 : i32, i32, i32
  }
  func.func @transform_3(%arg0: i32) -> (i32, i32, i32) {
    %c0_i32 = arith.constant 0 : i32
    %c0_i32_0 = arith.constant 0 : i32
    %c0_i32_1 = arith.constant 0 : i32
    return %arg0, %c0_i32, %c0_i32_0 : i32, i32, i32
  }
  func.func @transform_4(%arg0: i32) -> (i32, i32) {
    %c0_i32 = arith.constant 0 : i32
    %c0_i32_0 = arith.constant 0 : i32
    %c0_i32_1 = arith.constant 0 : i32
    return %c0_i32, %c0_i32_0 : i32, i32
  }
  func.func @transform_5(%arg0: i32) -> (i32, i32, i32) {
    %c0_i32 = arith.constant 0 : i32
    %c0_i32_0 = arith.constant 0 : i32
    %c0_i32_1 = arith.constant 0 : i32
    %c0_i32_2 = arith.constant 0 : i32
    return %c0_i32, %c0_i32_0, %c0_i32_1 : i32, i32, i32
  }
  func.func @transform_6(%arg0: i32) -> (i32, i32, i32) {
    %c0_i32 = arith.constant 0 : i32
    %c0_i32_0 = arith.constant 0 : i32
    %c0_i32_1 = arith.constant 0 : i32
    %c0_i32_2 = arith.constant 0 : i32
    return %c0_i32, %c0_i32_0, %c0_i32_1 : i32, i32, i32
  }
  func.func @transform_7(%arg0: i32) -> (i32, i32) {
    %c0_i32 = arith.constant 0 : i32
    %c0_i32_0 = arith.constant 0 : i32
    %c0_i32_1 = arith.constant 0 : i32
    return %c0_i32, %c0_i32_0 : i32, i32
  }
  func.func @transform_8(%arg0: i32) -> (i32, i32, i32) {
    %c0_i32 = arith.constant 0 : i32
    %c0_i32_0 = arith.constant 0 : i32
    %c0_i32_1 = arith.constant 0 : i32
    %c0_i32_2 = arith.constant 0 : i32
    return %c0_i32, %c0_i32_0, %c0_i32_1 : i32, i32, i32
  }
  func.func @transform_9(%arg0: i32) -> (i32, i32, i32) {
    %c0_i32 = arith.constant 0 : i32
    %c0_i32_0 = arith.constant 0 : i32
    %c0_i32_1 = arith.constant 0 : i32
    %c0_i32_2 = arith.constant 0 : i32
    return %c0_i32, %c0_i32_0, %c0_i32_1 : i32, i32, i32
  }
  func.func @transform_10(%arg0: i32) -> (i32, i32, i32) {
    %c0_i32 = arith.constant 0 : i32
    %c0_i32_0 = arith.constant 0 : i32
    %c0_i32_1 = arith.constant 0 : i32
    %c0_i32_2 = arith.constant 0 : i32
    return %c0_i32, %c0_i32_0, %c0_i32_1 : i32, i32, i32
  }
  func.func @transform_11(%arg0: i32) -> (i32, i32, i32) {
    %c0_i32 = arith.constant 0 : i32
    %c0_i32_0 = arith.constant 0 : i32
    %c0_i32_1 = arith.constant 0 : i32
    %c0_i32_2 = arith.constant 0 : i32
    return %c0_i32, %c0_i32_0, %c0_i32_1 : i32, i32, i32
  }
  func.func @transform_12(%arg0: i32) -> (i32, i32) {
    %c0_i32 = arith.constant 0 : i32
    %c0_i32_0 = arith.constant 0 : i32
    %c0_i32_1 = arith.constant 0 : i32
    return %c0_i32, %c0_i32_0 : i32, i32
  }
  func.func @transform_13(%arg0: i32) -> (i32, i32) {
    %c0_i32 = arith.constant 0 : i32
    %c0_i32_0 = arith.constant 0 : i32
    %c0_i32_1 = arith.constant 0 : i32
    return %c0_i32, %c0_i32_0 : i32, i32
  }
  func.func @transform_14(%arg0: i32) -> (i32, i32) {
    %c0_i32 = arith.constant 0 : i32
    %c0_i32_0 = arith.constant 0 : i32
    %c0_i32_1 = arith.constant 0 : i32
    return %c0_i32, %c0_i32_0 : i32, i32
  }
  func.func @transform_15(%arg0: i32) -> (i32, i32) {
    %c0_i32 = arith.constant 0 : i32
    %c0_i32_0 = arith.constant 0 : i32
    %c0_i32_1 = arith.constant 0 : i32
    return %c0_i32, %c0_i32_0 : i32, i32
  }
  func.func @transform_16(%arg0: i32) -> (i32, i32) {
    %c0_i32 = arith.constant 0 : i32
    %c0_i32_0 = arith.constant 0 : i32
    %c0_i32_1 = arith.constant 0 : i32
    return %c0_i32, %c0_i32_0 : i32, i32
  }
  func.func @transform_17(%arg0: i32) -> (i32, i32) {
    %c0_i32 = arith.constant 0 : i32
    %c0_i32_0 = arith.constant 0 : i32
    %c0_i32_1 = arith.constant 0 : i32
    return %c0_i32, %c0_i32_0 : i32, i32
  }
  func.func @transform_18(%arg0: i32) -> (i32, i32) {
    %c0_i32 = arith.constant 0 : i32
    %c0_i32_0 = arith.constant 0 : i32
    %c0_i32_1 = arith.constant 0 : i32
    return %c0_i32, %c0_i32_0 : i32, i32
  }
  func.func @transform_19(%arg0: i32) -> (i32, i32) {
    %c0_i32 = arith.constant 0 : i32
    %c0_i32_0 = arith.constant 0 : i32
    %c0_i32_1 = arith.constant 0 : i32
    return %c0_i32, %c0_i32_0 : i32, i32
  }
  func.func @transform_20(%arg0: i32) -> (i32, i32, i32) {
    %c0_i32 = arith.constant 0 : i32
    %c0_i32_0 = arith.constant 0 : i32
    %c0_i32_1 = arith.constant 0 : i32
    return %arg0, %c0_i32, %c0_i32_0 : i32, i32, i32
  }
}

</mosaic_0001>

<llo_original>
// kernel: tpu_custom_call.1
$region0: #{tpu_custom_call.1}
  #allocation0 [shape = 'u32[]', space=smem, size = 0x4, offset = 0x4, fixed_abs, tag = 'smem constant byte address 0x4 - core index']
  #allocation1 [shape = 'u32[144,128]{1,0:T(1,128)}', space=vmem, size = 0x12000, scoped, tag = 'internal scratch']
  #allocation2 [shape = 'bf16[8,8]{1,0:T(8,128)(2,1)}', space=vmem, size = 0x800, scoped, tag = 'scratch operand']
  #allocation3 [shape = 'bf16[8,8]{1,0:T(8,128)(2,1)}', space=vmem, size = 0x800, scoped, tag = 'scratch operand']
  #allocation4 [shape = 'f32[8,32]{1,0:T(8,128)}', space=vmem, size = 0x1000, scoped, tag = 'scratch operand']
  #allocation5 [shape = 'f32[8,8]{1,0:T(8,128)}', space=vmem, size = 0x1000, scoped, tag = 'scratch operand']
  %s0 = inlined_call_operand.hbm [shape: f32[2,8,32], index: 0, kind: input, shape index: {}]
  %s1 = inlined_call_operand.hbm [shape: f32[2,8,1], index: 1, kind: input, shape index: {}]
  %s2 = inlined_call_operand.hbm [shape: f32[2,8,8], index: 2, kind: input, shape index: {}]
  %s3 = inlined_call_operand.hbm [shape: f32[2,8,8], index: 3, kind: input, shape index: {}]
  %s4 = inlined_call_operand.hbm [shape: f32[4,32], index: 4, kind: input, shape index: {}]
  %s5 = inlined_call_operand.hbm [shape: bf16[4,32,24], index: 5, kind: input, shape index: {}]
  %s6 = inlined_call_operand.hbm [shape: bf16[4,8,32], index: 6, kind: input, shape index: {}]
  %s7 = inlined_call_operand.hbm [shape: bf16[32,24], index: 7, kind: input, shape index: {}]
  %s8 = inlined_call_operand.hbm [shape: bf16[4,8,8], index: 8, kind: input, shape index: {}]
  %s9 = inlined_call_operand.hbm [shape: bf16[4,8,8], index: 9, kind: input, shape index: {}]
  %s10 = inlined_call_operand.hbm [shape: bf16[4,8,8], index: 10, kind: input, shape index: {}]
  %s11 = inlined_call_operand.hbm [shape: bf16[4,8,8], index: 11, kind: input, shape index: {}]
  %s12 = inlined_call_operand.hbm [shape: bf16[8,32], index: 12, kind: input, shape index: {}]
  %s13 = inlined_call_operand.hbm [shape: bf16[32,128], index: 13, kind: input, shape index: {}]
  %s14 = inlined_call_operand.hbm [shape: bf16[64,32], index: 14, kind: input, shape index: {}]
  %s15 = inlined_call_operand.hbm [shape: bf16[32,32], index: 15, kind: input, shape index: {}]
  %s16 = inlined_call_operand.hbm [shape: bf16[16,64], index: 16, kind: input, shape index: {}]
  %s17 = inlined_call_operand.hbm [shape: bf16[16,64], index: 17, kind: input, shape index: {}]
  %s18 = inlined_call_operand.hbm [shape: bf16[64,8], index: 18, kind: input, shape index: {}]
  %s19 = inlined_call_operand.hbm [shape: bf16[8,32], index: 19, kind: input, shape index: {}]
  %s20 = inlined_call_operand.hbm [shape: f32[2,8,32], index: 20, kind: output, shape index: {}]
  %s21 = sld [smem:[#allocation0]]
  $region200: #{tpu_custom_call.1} parent=0
    _
  %s23 = ssub.s32 1, %s21
  %s24 = scalar_select 0, %s23, %s21
  $region1: #{tpu_custom_call.1} parent=0
    #allocation6 [shape = 'u8[8192]{0}', space=vmem, size = 0x2000, scoped, tag = 'input window, operand 0']
    #allocation7 [shape = 's32[2]{0}', space=sflag, size = 0x8, scoped, tag = 'scoped memory for tpu_custom_call.1']
    #allocation8 [shape = 's32[2]{0}', space=sflag, size = 0x8, scoped, tag = 'scoped memory for tpu_custom_call.1']
    #allocation9 [shape = 'u8[8192]{0}', space=vmem, size = 0x2000, scoped, tag = 'input window, operand 1']
    #allocation10 [shape = 's32[2]{0}', space=sflag, size = 0x8, scoped, tag = 'scoped memory for tpu_custom_call.1']
    #allocation11 [shape = 'u8[8192]{0}', space=vmem, size = 0x2000, scoped, tag = 'input window, operand 2']
    #allocation12 [shape = 'u8[8192]{0}', space=vmem, size = 0x2000, scoped, tag = 'input window, operand 3']
    #allocation13 [shape = 's32[2]{0}', space=sflag, size = 0x8, scoped, tag = 'scoped memory for tpu_custom_call.1']
    #allocation14 [shape = 'u8[2048]{0}', space=vmem, size = 0x800, scoped, tag = 'input window, operand 4, single buffered']
    #allocation15 [shape = 'u8[32768]{0}', space=vmem, size = 0x8000, scoped, tag = 'input window, operand 5, single buffered']
    #allocation16 [shape = 's32[1]{0}', space=sflag, size = 0x4, scoped, tag = 'scoped memory for tpu_custom_call.1']
    #allocation17 [shape = 'u8[8192]{0}', space=vmem, size = 0x2000, scoped, tag = 'input window, operand 6, single buffered']
    #allocation18 [shape = 'u8[8192]{0}', space=vmem, size = 0x2000, scoped, tag = 'input window, operand 7, single buffered']
    #allocation19 [shape = 's32[1]{0}', space=sflag, size = 0x4, scoped, tag = 'scoped memory for tpu_custom_call.1']
    #allocation20 [shape = 'u8[8192]{0}', space=vmem, size = 0x2000, scoped, tag = 'input window, operand 8, single buffered']
    #allocation21 [shape = 'u8[8192]{0}', space=vmem, size = 0x2000, scoped, tag = 'input window, operand 9, single buffered']
    #allocation22 [shape = 's32[1]{0}', space=sflag, size = 0x4, scoped, tag = 'scoped memory for tpu_custom_call.1']
    #allocation23 [shape = 'u8[8192]{0}', space=vmem, size = 0x2000, scoped, tag = 'input window, operand 10, single buffered']
    #allocation24 [shape = 'u8[8192]{0}', space=vmem, size = 0x2000, scoped, tag = 'input window, operand 11, single buffered']
    #allocation25 [shape = 's32[1]{0}', space=sflag, size = 0x4, scoped, tag = 'scoped memory for tpu_custom_call.1']
    #allocation26 [shape = 'u8[2048]{0}', space=vmem, size = 0x800, scoped, tag = 'input window, operand 12, single buffered']
    #allocation27 [shape = 'u8[8192]{0}', space=vmem, size = 0x2000, scoped, tag = 'input window, operand 13, single buffered']
    #allocation28 [shape = 's32[1]{0}', space=sflag, size = 0x4, scoped, tag = 'scoped memory for tpu_custom_call.1']
    #allocation29 [shape = 'u8[16384]{0}', space=vmem, size = 0x4000, scoped, tag = 'input window, operand 14, single buffered']
    #allocation30 [shape = 'u8[8192]{0}', space=vmem, size = 0x2000, scoped, tag = 'input window, operand 15, single buffered']
    #allocation31 [shape = 's32[1]{0}', space=sflag, size = 0x4, scoped, tag = 'scoped memory for tpu_custom_call.1']
    #allocation32 [shape = 'u8[4096]{0}', space=vmem, size = 0x1000, scoped, tag = 'input window, operand 16, single buffered']
    #allocation33 [shape = 'u8[4096]{0}', space=vmem, size = 0x1000, scoped, tag = 'input window, operand 17, single buffered']
    #allocation34 [shape = 's32[1]{0}', space=sflag, size = 0x4, scoped, tag = 'scoped memory for tpu_custom_call.1']
    #allocation35 [shape = 'u8[16384]{0}', space=vmem, size = 0x4000, scoped, tag = 'input window, operand 18, single buffered']
    #allocation36 [shape = 'u8[2048]{0}', space=vmem, size = 0x800, scoped, tag = 'input window, operand 19, single buffered']
    #allocation37 [shape = 's32[1]{0}', space=sflag, size = 0x4, scoped, tag = 'scoped memory for tpu_custom_call.1']
    #allocation38 [shape = 'u8[8192]{0}', space=vmem, size = 0x2000, scoped, tag = 'output window, operand 0']
    %25 = vsyncpa [#allocation7], 0
    %s26 = scalar_lea.sflag [#allocation7], 1
    %27 = vsyncpa %s26, 0
    %28 = vsyncpa [#allocation10], 0
    %s29 = scalar_lea.sflag [#allocation10], 1
    %30 = vsyncpa %s29, 0
    %31 = vsyncpa [#allocation13], 0
    %s32 = scalar_lea.sflag [#allocation13], 1
    %33 = vsyncpa %s32, 0
    %34 = vsyncpa [#allocation16], 0
    %35 = vsyncpa [#allocation19], 0
    %36 = vsyncpa [#allocation22], 0
    %37 = vsyncpa [#allocation25], 0
    %38 = vsyncpa [#allocation28], 0
    %39 = vsyncpa [#allocation31], 0
    %40 = vsyncpa [#allocation34], 0
    %41 = vsyncpa [#allocation37], 0
    %42 = vsyncpa [#allocation8], 0
    %s43 = scalar_lea.sflag [#allocation8], 1
    %44 = vsyncpa %s43, 0
    loop: start=0, step=1, limit=4
    $region2: #{tpu_custom_call.1} parent=1 // loop_pre_header
      _
    $region3: #{tpu_custom_call.1} parent=1 // loop_header
      %s46 = sphi 0, %s50
      %p47 = scmp.ge.s32.totalorder %s46, 4
      %s56 = sphi 0, %s58
      %s59 = sphi 0, %s56
      %s60 = sphi 0, %s59
      %s76 = sphi 0, %s60
      %s82 = sphi 0, %s84
      %s85 = sphi 0, %s82
      %s86 = sphi 0, %s85
      %s102 = sphi 0, %s86
      %s108 = sphi 0, %s110
      %s111 = sphi 0, %s108
      %s112 = sphi 0, %s111
      %s128 = sphi 0, %s112
      %s134 = sphi 0, %s136
      %s137 = sphi 0, %s134
      %s138 = sphi 0, %s137
      %s154 = sphi 0, %s138
      %s158 = sphi 0, %s158
      %s160 = sphi 0, %s158
      %s161 = sphi 0, %s160
      %s175 = sphi 0, %s161
      %s179 = sphi 0, %s179
      %s181 = sphi 0, %s179
      %s182 = sphi 0, %s181
      %s196 = sphi 0, %s182
      %s200 = sphi 0, %s200
      %s202 = sphi 0, %s200
      %s203 = sphi 0, %s202
      %s217 = sphi 0, %s203
      %s221 = sphi 0, %s221
      %s223 = sphi 0, %s221
      %s224 = sphi 0, %s223
      %s238 = sphi 0, %s224
      %s242 = sphi 0, %s242
      %s244 = sphi 0, %s242
      %s245 = sphi 0, %s244
      %s259 = sphi 0, %s245
      %s263 = sphi 0, %s263
      %s265 = sphi 0, %s263
      %s266 = sphi 0, %s265
      %s280 = sphi 0, %s266
      %s284 = sphi 0, %s284
      %s286 = sphi 0, %s284
      %s287 = sphi 0, %s286
      %s301 = sphi 0, %s287
      %s305 = sphi 0, %s305
      %s307 = sphi 0, %s305
      %s308 = sphi 0, %s307
      %s322 = sphi 0, %s308
      %s326 = sphi 0, %s326
      %s328 = sphi 0, %s326
      %s329 = sphi 0, %s328
      %s343 = sphi 0, %s329
      %s347 = sphi 0, %s347
      %s349 = sphi 0, %s347
      %s350 = sphi 0, %s349
      %s364 = sphi 0, %s350
      %s368 = sphi 0, %s368
      %s370 = sphi 0, %s368
      %s371 = sphi 0, %s370
      %s385 = sphi 0, %s371
      %s389 = sphi 0, %s389
      %s391 = sphi 0, %s389
      %s392 = sphi 0, %s391
      %s406 = sphi 0, %s392
      %s410 = sphi 0, %s410
      %s412 = sphi 0, %s410
      %s413 = sphi 0, %s412
      %s427 = sphi 0, %s413
      %s431 = sphi 0, %s431
      %s433 = sphi 0, %s431
      %s434 = sphi 0, %s433
      %s448 = sphi 0, %s434
      %s452 = sphi 0, %s452
      %s454 = sphi 0, %s452
      %s455 = sphi 0, %s454
      %s469 = sphi 0, %s455
      %s473 = sphi 0, %s473
      %s475 = sphi 0, %s473
      %s476 = sphi 0, %s475
      %s490 = sphi 0, %s476
      %s496 = sphi 0, %s498
      %s499 = sphi 0, %s496
      %s500 = sphi 0, %s499
      %s516 = sphi 0, %s500
    $region4: #{tpu_custom_call.1} parent=1 // loop_header_branch
      %49 = sbr.rel (%p47) target = $region8
    $region5: #{tpu_custom_call.1} parent=1 // loop_body
      %s51 = ssub.s32 %s46, 1
      %s52 = ssub.s32 %s46, 2
      %s53 = sadd.s32 %s46, 1
      %s54 = ssub.s32 %s46, %s53
      %p55 = scmp.eq.s32.totalorder %s54, 0
      %s57 = sadd.s32 %s56, 1
      %s58 = scalar_select %p55, %s56, %s57
      %p61 = pneg %p55
      %p62 = scmp.eq.s32.totalorder %s46, 1
      %p63 = por %p61, %p62
      %p64 = scmp.ne.s32.totalorder %s56, %s59
      %p65 = scmp.eq.s32.totalorder %s46, 0
      %p66 = por %p64, %p65
      %p67 = scmp.ne.s32.totalorder %s56, %s59
      %p68 = scmp.eq.s32.totalorder %s51, 1
      %p69 = por %p67, %p68
      %p70 = scmp.ne.s32.totalorder %s59, %s60
      %p71 = scmp.eq.s32.totalorder %s51, 0
      %p72 = por %p70, %p71
      %p73 = scmp.ne.s32.totalorder %s59, %s60
      %p74 = scmp.eq.s32.totalorder %s52, 1
      %p75 = por %p73, %p74
      %p77 = scmp.ne.s32.totalorder %s60, %s76
      %p78 = scmp.eq.s32.totalorder %s52, 0
      %p79 = por %p77, %p78
      %s80 = ssub.s32 %s46, %s53
      %p81 = scmp.eq.s32.totalorder %s80, 0
      %s83 = sadd.s32 %s82, 1
      %s84 = scalar_select %p81, %s82, %s83
      %p87 = pneg %p81
      %p88 = scmp.eq.s32.totalorder %s46, 1
      %p89 = por %p87, %p88
      %p90 = scmp.ne.s32.totalorder %s82, %s85
      %p91 = scmp.eq.s32.totalorder %s46, 0
      %p92 = por %p90, %p91
      %p93 = scmp.ne.s32.totalorder %s82, %s85
      %p94 = scmp.eq.s32.totalorder %s51, 1
      %p95 = por %p93, %p94
      %p96 = scmp.ne.s32.totalorder %s85, %s86
      %p97 = scmp.eq.s32.totalorder %s51, 0
      %p98 = por %p96, %p97
      %p99 = scmp.ne.s32.totalorder %s85, %s86
      %p100 = scmp.eq.s32.totalorder %s52, 1
      %p101 = por %p99, %p100
      %p103 = scmp.ne.s32.totalorder %s86, %s102
      %p104 = scmp.eq.s32.totalorder %s52, 0
      %p105 = por %p103, %p104
      %s106 = ssub.s32 %s46, %s53
      %p107 = scmp.eq.s32.totalorder %s106, 0
      %s109 = sadd.s32 %s108, 1
      %s110 = scalar_select %p107, %s108, %s109
      %p113 = pneg %p107
      %p114 = scmp.eq.s32.totalorder %s46, 1
      %p115 = por %p113, %p114
      %p116 = scmp.ne.s32.totalorder %s108, %s111
      %p117 = scmp.eq.s32.totalorder %s46, 0
      %p118 = por %p116, %p117
      %p119 = scmp.ne.s32.totalorder %s108, %s111
      %p120 = scmp.eq.s32.totalorder %s51, 1
      %p121 = por %p119, %p120
      %p122 = scmp.ne.s32.totalorder %s111, %s112
      %p123 = scmp.eq.s32.totalorder %s51, 0
      %p124 = por %p122, %p123
      %p125 = scmp.ne.s32.totalorder %s111, %s112
      %p126 = scmp.eq.s32.totalorder %s52, 1
      %p127 = por %p125, %p126
      %p129 = scmp.ne.s32.totalorder %s112, %s128
      %p130 = scmp.eq.s32.totalorder %s52, 0
      %p131 = por %p129, %p130
      %s132 = ssub.s32 %s46, %s53
      %p133 = scmp.eq.s32.totalorder %s132, 0
      %s135 = sadd.s32 %s134, 1
      %s136 = scalar_select %p133, %s134, %s135
      %p139 = pneg %p133
      %p140 = scmp.eq.s32.totalorder %s46, 1
      %p141 = por %p139, %p140
      %p142 = scmp.ne.s32.totalorder %s134, %s137
      %p143 = scmp.eq.s32.totalorder %s46, 0
      %p144 = por %p142, %p143
      %p145 = scmp.ne.s32.totalorder %s134, %s137
      %p146 = scmp.eq.s32.totalorder %s51, 1
      %p147 = por %p145, %p146
      %p148 = scmp.ne.s32.totalorder %s137, %s138
      %p149 = scmp.eq.s32.totalorder %s51, 0
      %p150 = por %p148, %p149
      %p151 = scmp.ne.s32.totalorder %s137, %s138
      %p152 = scmp.eq.s32.totalorder %s52, 1
      %p153 = por %p151, %p152
      %p155 = scmp.ne.s32.totalorder %s138, %s154
      %p156 = scmp.eq.s32.totalorder %s52, 0
      %p157 = por %p155, %p156
      %s159 = sadd.s32 %s158, 1
      %p162 = scmp.eq.s32.totalorder %s46, 1
      %p163 = scmp.ne.s32.totalorder %s158, %s160
      %p164 = scmp.eq.s32.totalorder %s46, 0
      %p165 = por %p163, %p164
      %p166 = scmp.ne.s32.totalorder %s158, %s160
      %p167 = scmp.eq.s32.totalorder %s51, 1
      %p168 = por %p166, %p167
      %p169 = scmp.ne.s32.totalorder %s160, %s161
      %p170 = scmp.eq.s32.totalorder %s51, 0
      %p171 = por %p169, %p170
      %p172 = scmp.ne.s32.totalorder %s160, %s161
      %p173 = scmp.eq.s32.totalorder %s52, 1
      %p174 = por %p172, %p173
      %p176 = scmp.ne.s32.totalorder %s161, %s175
      %p177 = scmp.eq.s32.totalorder %s52, 0
      %p178 = por %p176, %p177
      %s180 = sadd.s32 %s179, 1
      %p183 = scmp.eq.s32.totalorder %s46, 1
      %p184 = scmp.ne.s32.totalorder %s179, %s181
      %p185 = scmp.eq.s32.totalorder %s46, 0
      %p186 = por %p184, %p185
      %p187 = scmp.ne.s32.totalorder %s179, %s181
      %p188 = scmp.eq.s32.totalorder %s51, 1
      %p189 = por %p187, %p188
      %p190 = scmp.ne.s32.totalorder %s181, %s182
      %p191 = scmp.eq.s32.totalorder %s51, 0
      %p192 = por %p190, %p191
      %p193 = scmp.ne.s32.totalorder %s181, %s182
      %p194 = scmp.eq.s32.totalorder %s52, 1
      %p195 = por %p193, %p194
      %p197 = scmp.ne.s32.totalorder %s182, %s196
      %p198 = scmp.eq.s32.totalorder %s52, 0
      %p199 = por %p197, %p198
      %s201 = sadd.s32 %s200, 1
      %p204 = scmp.eq.s32.totalorder %s46, 1
      %p205 = scmp.ne.s32.totalorder %s200, %s202
      %p206 = scmp.eq.s32.totalorder %s46, 0
      %p207 = por %p205, %p206
      %p208 = scmp.ne.s32.totalorder %s200, %s202
      %p209 = scmp.eq.s32.totalorder %s51, 1
      %p210 = por %p208, %p209
      %p211 = scmp.ne.s32.totalorder %s202, %s203
      %p212 = scmp.eq.s32.totalorder %s51, 0
      %p213 = por %p211, %p212
      %p214 = scmp.ne.s32.totalorder %s202, %s203
      %p215 = scmp.eq.s32.totalorder %s52, 1
      %p216 = por %p214, %p215
      %p218 = scmp.ne.s32.totalorder %s203, %s217
      %p219 = scmp.eq.s32.totalorder %s52, 0
      %p220 = por %p218, %p219
      %s222 = sadd.s32 %s221, 1
      %p225 = scmp.eq.s32.totalorder %s46, 1
      %p226 = scmp.ne.s32.totalorder %s221, %s223
      %p227 = scmp.eq.s32.totalorder %s46, 0
      %p228 = por %p226, %p227
      %p229 = scmp.ne.s32.totalorder %s221, %s223
      %p230 = scmp.eq.s32.totalorder %s51, 1
      %p231 = por %p229, %p230
      %p232 = scmp.ne.s32.totalorder %s223, %s224
      %p233 = scmp.eq.s32.totalorder %s51, 0
      %p234 = por %p232, %p233
      %p235 = scmp.ne.s32.totalorder %s223, %s224
      %p236 = scmp.eq.s32.totalorder %s52, 1
      %p237 = por %p235, %p236
      %p239 = scmp.ne.s32.totalorder %s224, %s238
      %p240 = scmp.eq.s32.totalorder %s52, 0
      %p241 = por %p239, %p240
      %s243 = sadd.s32 %s242, 1
      %p246 = scmp.eq.s32.totalorder %s46, 1
      %p247 = scmp.ne.s32.totalorder %s242, %s244
      %p248 = scmp.eq.s32.totalorder %s46, 0
      %p249 = por %p247, %p248
      %p250 = scmp.ne.s32.totalorder %s242, %s244
      %p251 = scmp.eq.s32.totalorder %s51, 1
      %p252 = por %p250, %p251
      %p253 = scmp.ne.s32.totalorder %s244, %s245
      %p254 = scmp.eq.s32.totalorder %s51, 0
      %p255 = por %p253, %p254
      %p256 = scmp.ne.s32.totalorder %s244, %s245
      %p257 = scmp.eq.s32.totalorder %s52, 1
      %p258 = por %p256, %p257
      %p260 = scmp.ne.s32.totalorder %s245, %s259
      %p261 = scmp.eq.s32.totalorder %s52, 0
      %p262 = por %p260, %p261
      %s264 = sadd.s32 %s263, 1
      %p267 = scmp.eq.s32.totalorder %s46, 1
      %p268 = scmp.ne.s32.totalorder %s263, %s265
      %p269 = scmp.eq.s32.totalorder %s46, 0
      %p270 = por %p268, %p269
      %p271 = scmp.ne.s32.totalorder %s263, %s265
      %p272 = scmp.eq.s32.totalorder %s51, 1
      %p273 = por %p271, %p272
      %p274 = scmp.ne.s32.totalorder %s265, %s266
      %p275 = scmp.eq.s32.totalorder %s51, 0
      %p276 = por %p274, %p275
      %p277 = scmp.ne.s32.totalorder %s265, %s266
      %p278 = scmp.eq.s32.totalorder %s52, 1
      %p279 = por %p277, %p278
      %p281 = scmp.ne.s32.totalorder %s266, %s280
      %p282 = scmp.eq.s32.totalorder %s52, 0
      %p283 = por %p281, %p282
      %s285 = sadd.s32 %s284, 1
      %p288 = scmp.eq.s32.totalorder %s46, 1
      %p289 = scmp.ne.s32.totalorder %s284, %s286
      %p290 = scmp.eq.s32.totalorder %s46, 0
      %p291 = por %p289, %p290
      %p292 = scmp.ne.s32.totalorder %s284, %s286
      %p293 = scmp.eq.s32.totalorder %s51, 1
      %p294 = por %p292, %p293
      %p295 = scmp.ne.s32.totalorder %s286, %s287
      %p296 = scmp.eq.s32.totalorder %s51, 0
      %p297 = por %p295, %p296
      %p298 = scmp.ne.s32.totalorder %s286, %s287
      %p299 = scmp.eq.s32.totalorder %s52, 1
      %p300 = por %p298, %p299
      %p302 = scmp.ne.s32.totalorder %s287, %s301
      %p303 = scmp.eq.s32.totalorder %s52, 0
      %p304 = por %p302, %p303
      %s306 = sadd.s32 %s305, 1
      %p309 = scmp.eq.s32.totalorder %s46, 1
      %p310 = scmp.ne.s32.totalorder %s305, %s307
      %p311 = scmp.eq.s32.totalorder %s46, 0
      %p312 = por %p310, %p311
      %p313 = scmp.ne.s32.totalorder %s305, %s307
      %p314 = scmp.eq.s32.totalorder %s51, 1
      %p315 = por %p313, %p314
      %p316 = scmp.ne.s32.totalorder %s307, %s308
      %p317 = scmp.eq.s32.totalorder %s51, 0
      %p318 = por %p316, %p317
      %p319 = scmp.ne.s32.totalorder %s307, %s308
      %p320 = scmp.eq.s32.totalorder %s52, 1
      %p321 = por %p319, %p320
      %p323 = scmp.ne.s32.totalorder %s308, %s322
      %p324 = scmp.eq.s32.totalorder %s52, 0
      %p325 = por %p323, %p324
      %s327 = sadd.s32 %s326, 1
      %p330 = scmp.eq.s32.totalorder %s46, 1
      %p331 = scmp.ne.s32.totalorder %s326, %s328
      %p332 = scmp.eq.s32.totalorder %s46, 0
      %p333 = por %p331, %p332
      %p334 = scmp.ne.s32.totalorder %s326, %s328
      %p335 = scmp.eq.s32.totalorder %s51, 1
      %p336 = por %p334, %p335
      %p337 = scmp.ne.s32.totalorder %s328, %s329
      %p338 = scmp.eq.s32.totalorder %s51, 0
      %p339 = por %p337, %p338
      %p340 = scmp.ne.s32.totalorder %s328, %s329
      %p341 = scmp.eq.s32.totalorder %s52, 1
      %p342 = por %p340, %p341
      %p344 = scmp.ne.s32.totalorder %s329, %s343
      %p345 = scmp.eq.s32.totalorder %s52, 0
      %p346 = por %p344, %p345
      %s348 = sadd.s32 %s347, 1
      %p351 = scmp.eq.s32.totalorder %s46, 1
      %p352 = scmp.ne.s32.totalorder %s347, %s349
      %p353 = scmp.eq.s32.totalorder %s46, 0
      %p354 = por %p352, %p353
      %p355 = scmp.ne.s32.totalorder %s347, %s349
      %p356 = scmp.eq.s32.totalorder %s51, 1
      %p357 = por %p355, %p356
      %p358 = scmp.ne.s32.totalorder %s349, %s350
      %p359 = scmp.eq.s32.totalorder %s51, 0
      %p360 = por %p358, %p359
      %p361 = scmp.ne.s32.totalorder %s349, %s350
      %p362 = scmp.eq.s32.totalorder %s52, 1
      %p363 = por %p361, %p362
      %p365 = scmp.ne.s32.totalorder %s350, %s364
      %p366 = scmp.eq.s32.totalorder %s52, 0
      %p367 = por %p365, %p366
      %s369 = sadd.s32 %s368, 1
      %p372 = scmp.eq.s32.totalorder %s46, 1
      %p373 = scmp.ne.s32.totalorder %s368, %s370
      %p374 = scmp.eq.s32.totalorder %s46, 0
      %p375 = por %p373, %p374
      %p376 = scmp.ne.s32.totalorder %s368, %s370
      %p377 = scmp.eq.s32.totalorder %s51, 1
      %p378 = por %p376, %p377
      %p379 = scmp.ne.s32.totalorder %s370, %s371
      %p380 = scmp.eq.s32.totalorder %s51, 0
      %p381 = por %p379, %p380
      %p382 = scmp.ne.s32.totalorder %s370, %s371
      %p383 = scmp.eq.s32.totalorder %s52, 1
      %p384 = por %p382, %p383
      %p386 = scmp.ne.s32.totalorder %s371, %s385
      %p387 = scmp.eq.s32.totalorder %s52, 0
      %p388 = por %p386, %p387
      %s390 = sadd.s32 %s389, 1
      %p393 = scmp.eq.s32.totalorder %s46, 1
      %p394 = scmp.ne.s32.totalorder %s389, %s391
      %p395 = scmp.eq.s32.totalorder %s46, 0
      %p396 = por %p394, %p395
      %p397 = scmp.ne.s32.totalorder %s389, %s391
      %p398 = scmp.eq.s32.totalorder %s51, 1
      %p399 = por %p397, %p398
      %p400 = scmp.ne.s32.totalorder %s391, %s392
      %p401 = scmp.eq.s32.totalorder %s51, 0
      %p402 = por %p400, %p401
      %p403 = scmp.ne.s32.totalorder %s391, %s392
      %p404 = scmp.eq.s32.totalorder %s52, 1
      %p405 = por %p403, %p404
      %p407 = scmp.ne.s32.totalorder %s392, %s406
      %p408 = scmp.eq.s32.totalorder %s52, 0
      %p409 = por %p407, %p408
      %s411 = sadd.s32 %s410, 1
      %p414 = scmp.eq.s32.totalorder %s46, 1
      %p415 = scmp.ne.s32.totalorder %s410, %s412
      %p416 = scmp.eq.s32.totalorder %s46, 0
      %p417 = por %p415, %p416
      %p418 = scmp.ne.s32.totalorder %s410, %s412
      %p419 = scmp.eq.s32.totalorder %s51, 1
      %p420 = por %p418, %p419
      %p421 = scmp.ne.s32.totalorder %s412, %s413
      %p422 = scmp.eq.s32.totalorder %s51, 0
      %p423 = por %p421, %p422
      %p424 = scmp.ne.s32.totalorder %s412, %s413
      %p425 = scmp.eq.s32.totalorder %s52, 1
      %p426 = por %p424, %p425
      %p428 = scmp.ne.s32.totalorder %s413, %s427
      %p429 = scmp.eq.s32.totalorder %s52, 0
      %p430 = por %p428, %p429
      %s432 = sadd.s32 %s431, 1
      %p435 = scmp.eq.s32.totalorder %s46, 1
      %p436 = scmp.ne.s32.totalorder %s431, %s433
      %p437 = scmp.eq.s32.totalorder %s46, 0
      %p438 = por %p436, %p437
      %p439 = scmp.ne.s32.totalorder %s431, %s433
      %p440 = scmp.eq.s32.totalorder %s51, 1
      %p441 = por %p439, %p440
      %p442 = scmp.ne.s32.totalorder %s433, %s434
      %p443 = scmp.eq.s32.totalorder %s51, 0
      %p444 = por %p442, %p443
      %p445 = scmp.ne.s32.totalorder %s433, %s434
      %p446 = scmp.eq.s32.totalorder %s52, 1
      %p447 = por %p445, %p446
      %p449 = scmp.ne.s32.totalorder %s434, %s448
      %p450 = scmp.eq.s32.totalorder %s52, 0
      %p451 = por %p449, %p450
      %s453 = sadd.s32 %s452, 1
      %p456 = scmp.eq.s32.totalorder %s46, 1
      %p457 = scmp.ne.s32.totalorder %s452, %s454
      %p458 = scmp.eq.s32.totalorder %s46, 0
      %p459 = por %p457, %p458
      %p460 = scmp.ne.s32.totalorder %s452, %s454
      %p461 = scmp.eq.s32.totalorder %s51, 1
      %p462 = por %p460, %p461
      %p463 = scmp.ne.s32.totalorder %s454, %s455
      %p464 = scmp.eq.s32.totalorder %s51, 0
      %p465 = por %p463, %p464
      %p466 = scmp.ne.s32.totalorder %s454, %s455
      %p467 = scmp.eq.s32.totalorder %s52, 1
      %p468 = por %p466, %p467
      %p470 = scmp.ne.s32.totalorder %s455, %s469
      %p471 = scmp.eq.s32.totalorder %s52, 0
      %p472 = por %p470, %p471
      %s474 = sadd.s32 %s473, 1
      %p477 = scmp.eq.s32.totalorder %s46, 1
      %p478 = scmp.ne.s32.totalorder %s473, %s475
      %p479 = scmp.eq.s32.totalorder %s46, 0
      %p480 = por %p478, %p479
      %p481 = scmp.ne.s32.totalorder %s473, %s475
      %p482 = scmp.eq.s32.totalorder %s51, 1
      %p483 = por %p481, %p482
      %p484 = scmp.ne.s32.totalorder %s475, %s476
      %p485 = scmp.eq.s32.totalorder %s51, 0
      %p486 = por %p484, %p485
      %p487 = scmp.ne.s32.totalorder %s475, %s476
      %p488 = scmp.eq.s32.totalorder %s52, 1
      %p489 = por %p487, %p488
      %p491 = scmp.ne.s32.totalorder %s476, %s490
      %p492 = scmp.eq.s32.totalorder %s52, 0
      %p493 = por %p491, %p492
      %s494 = ssub.s32 %s46, %s53
      %p495 = scmp.eq.s32.totalorder %s494, 0
      %s497 = sadd.s32 %s496, 1
      %s498 = scalar_select %p495, %s496, %s497
      %p501 = pneg %p495
      %p502 = scmp.eq.s32.totalorder %s46, 1
      %p503 = por %p501, %p502
      %p504 = scmp.ne.s32.totalorder %s496, %s499
      %p505 = scmp.eq.s32.totalorder %s46, 0
      %p506 = por %p504, %p505
      %p507 = scmp.ne.s32.totalorder %s496, %s499
      %p508 = scmp.eq.s32.totalorder %s51, 1
      %p509 = por %p507, %p508
      %p510 = scmp.ne.s32.totalorder %s499, %s500
      %p511 = scmp.eq.s32.totalorder %s51, 0
      %p512 = por %p510, %p511
      %p513 = scmp.ne.s32.totalorder %s499, %s500
      %p514 = scmp.eq.s32.totalorder %s52, 1
      %p515 = por %p513, %p514
      %p517 = scmp.ne.s32.totalorder %s500, %s516
      %p518 = scmp.eq.s32.totalorder %s52, 0
      %p519 = por %p517, %p518
      %p520 = scmp.le.s32.totalorder 1, %s46
      %p521 = scmp.lt.s32.totalorder %s46, 3
      %p522 = pnand %p520, %p521
      %p523 = pneg %p522
      // Predicated region
      $region9: #{tpu_custom_call.1} parent=5 // pred_check
        _
      $region10: #{tpu_custom_call.1} parent=5 // pred_check_branch
        %525 = sbr.rel (%p522) target = $region12
      $region11: #{tpu_custom_call.1} parent=5 // pred_region
        %s526 = ssub.s32 %s46, 1
        // Predicated region
        $region13: #{tpu_custom_call.1} parent=11 // pred_check
          %p527 = pneg %p171
        $region14: #{tpu_custom_call.1} parent=11 // pred_check_branch
          %529 = sbr.rel (%p527) target = $region16
        $region15: #{tpu_custom_call.1} parent=11 // pred_region
          %s531 = ssub.s32 64, 64
          %532 = vsyncadd [#allocation13], %s531
          %s534 = sshll.u32 [#allocation14], 4
          %s535 = int_to_ptr.vmem [resolvable:$true] %s534
          %537 = dma.hbm_to_vmem [thread:$0]  %s4, 64, %s535, [#allocation13]
        $region16: #{tpu_custom_call.1} parent=11 // pred_fallthru
          _
        // Predicated region
        $region17: #{tpu_custom_call.1} parent=11 // pred_check
          %p538 = pneg %p192
        $region18: #{tpu_custom_call.1} parent=11 // pred_check_branch
          %540 = sbr.rel (%p538) target = $region20
        $region19: #{tpu_custom_call.1} parent=11 // pred_region
          %s542 = ssub.s32 1024, 1024
          %543 = vsyncadd [#allocation16], %s542
          %s544 = sshll.u32 [#allocation15], 4
          %s545 = int_to_ptr.vmem [resolvable:$true] %s544
          %550 = dma.hbm_to_vmem [thread:$0]  %s5, 1024, %s545, [#allocation16], 64, 64, 4
        $region20: #{tpu_custom_call.1} parent=11 // pred_fallthru
          _
        // Predicated region
        $region21: #{tpu_custom_call.1} parent=11 // pred_check
          %p551 = pneg %p213
        $region22: #{tpu_custom_call.1} parent=11 // pred_check_branch
          %553 = sbr.rel (%p551) target = $region24
        $region23: #{tpu_custom_call.1} parent=11 // pred_region
          %s555 = ssub.s32 256, 256
          %556 = vsyncadd [#allocation16], %s555
          %s557 = sshll.u32 [#allocation17], 4
          %s558 = int_to_ptr.vmem [resolvable:$true] %s557
          %563 = dma.hbm_to_vmem [thread:$0]  %s6, 256, %s558, [#allocation16], 64, 64, 4
        $region24: #{tpu_custom_call.1} parent=11 // pred_fallthru
          _
        // Predicated region
        $region25: #{tpu_custom_call.1} parent=11 // pred_check
          %p564 = pneg %p234
        $region26: #{tpu_custom_call.1} parent=11 // pred_check_branch
          %566 = sbr.rel (%p564) target = $region28
        $region27: #{tpu_custom_call.1} parent=11 // pred_region
          %s568 = ssub.s32 256, 256
          %569 = vsyncadd [#allocation19], %s568
          %s570 = sshll.u32 [#allocation18], 4
          %s571 = int_to_ptr.vmem [resolvable:$true] %s570
          %576 = dma.hbm_to_vmem [thread:$0]  %s7, 256, %s571, [#allocation19], 64, 64, 4
        $region28: #{tpu_custom_call.1} parent=11 // pred_fallthru
          _
        // Predicated region
        $region29: #{tpu_custom_call.1} parent=11 // pred_check
          %p577 = pneg %p255
        $region30: #{tpu_custom_call.1} parent=11 // pred_check_branch
          %579 = sbr.rel (%p577) target = $region32
        $region31: #{tpu_custom_call.1} parent=11 // pred_region
          %s581 = ssub.s32 256, 256
          %582 = vsyncadd [#allocation19], %s581
          %s583 = sshll.u32 [#allocation20], 4
          %s584 = int_to_ptr.vmem [resolvable:$true] %s583
          %589 = dma.hbm_to_vmem [thread:$0]  %s8, 256, %s584, [#allocation19], 64, 64, 4
        $region32: #{tpu_custom_call.1} parent=11 // pred_fallthru
          _
        // Predicated region
        $region33: #{tpu_custom_call.1} parent=11 // pred_check
          %p590 = pneg %p276
        $region34: #{tpu_custom_call.1} parent=11 // pred_check_branch
          %592 = sbr.rel (%p590) target = $region36
        $region35: #{tpu_custom_call.1} parent=11 // pred_region
          %s594 = ssub.s32 256, 256
          %595 = vsyncadd [#allocation22], %s594
          %s596 = sshll.u32 [#allocation21], 4
          %s597 = int_to_ptr.vmem [resolvable:$true] %s596
          %602 = dma.hbm_to_vmem [thread:$0]  %s9, 256, %s597, [#allocation22], 64, 64, 4
        $region36: #{tpu_custom_call.1} parent=11 // pred_fallthru
          _
        // Predicated region
        $region37: #{tpu_custom_call.1} parent=11 // pred_check
          %p603 = pneg %p297
        $region38: #{tpu_custom_call.1} parent=11 // pred_check_branch
          %605 = sbr.rel (%p603) target = $region40
        $region39: #{tpu_custom_call.1} parent=11 // pred_region
          %s607 = ssub.s32 256, 256
          %608 = vsyncadd [#allocation22], %s607
          %s609 = sshll.u32 [#allocation23], 4
          %s610 = int_to_ptr.vmem [resolvable:$true] %s609
          %615 = dma.hbm_to_vmem [thread:$0]  %s10, 256, %s610, [#allocation22], 64, 64, 4
        $region40: #{tpu_custom_call.1} parent=11 // pred_fallthru
          _
        // Predicated region
        $region41: #{tpu_custom_call.1} parent=11 // pred_check
          %p616 = pneg %p318
        $region42: #{tpu_custom_call.1} parent=11 // pred_check_branch
          %618 = sbr.rel (%p616) target = $region44
        $region43: #{tpu_custom_call.1} parent=11 // pred_region
          %s620 = ssub.s32 256, 256
          %621 = vsyncadd [#allocation25], %s620
          %s622 = sshll.u32 [#allocation24], 4
          %s623 = int_to_ptr.vmem [resolvable:$true] %s622
          %628 = dma.hbm_to_vmem [thread:$0]  %s11, 256, %s623, [#allocation25], 64, 64, 4
        $region44: #{tpu_custom_call.1} parent=11 // pred_fallthru
          _
        // Predicated region
        $region45: #{tpu_custom_call.1} parent=11 // pred_check
          %p629 = pneg %p339
        $region46: #{tpu_custom_call.1} parent=11 // pred_check_branch
          %631 = sbr.rel (%p629) target = $region48
        $region47: #{tpu_custom_call.1} parent=11 // pred_region
          %s633 = ssub.s32 64, 64
          %634 = vsyncadd [#allocation25], %s633
          %s636 = sshll.u32 [#allocation26], 4
          %s637 = int_to_ptr.vmem [resolvable:$true] %s636
          %639 = dma.hbm_to_vmem [thread:$0]  %s12, 64, %s637, [#allocation25]
        $region48: #{tpu_custom_call.1} parent=11 // pred_fallthru
          _
        // Predicated region
        $region49: #{tpu_custom_call.1} parent=11 // pred_check
          %p640 = pneg %p360
        $region50: #{tpu_custom_call.1} parent=11 // pred_check_branch
          %642 = sbr.rel (%p640) target = $region52
        $region51: #{tpu_custom_call.1} parent=11 // pred_region
          %s644 = ssub.s32 256, 256
          %645 = vsyncadd [#allocation28], %s644
          %s646 = sshll.u32 [#allocation27], 4
          %s647 = int_to_ptr.vmem [resolvable:$true] %s646
          %652 = dma.hbm_to_vmem [thread:$0]  %s13, 256, %s647, [#allocation28], 64, 64, 4
        $region52: #{tpu_custom_call.1} parent=11 // pred_fallthru
          _
        // Predicated region
        $region53: #{tpu_custom_call.1} parent=11 // pred_check
          %p653 = pneg %p381
        $region54: #{tpu_custom_call.1} parent=11 // pred_check_branch
          %655 = sbr.rel (%p653) target = $region56
        $region55: #{tpu_custom_call.1} parent=11 // pred_region
          %s657 = ssub.s32 512, 512
          %658 = vsyncadd [#allocation28], %s657
          %s659 = sshll.u32 [#allocation29], 4
          %s660 = int_to_ptr.vmem [resolvable:$true] %s659
          %665 = dma.hbm_to_vmem [thread:$0]  %s14, 512, %s660, [#allocation28], 64, 64, 4
        $region56: #{tpu_custom_call.1} parent=11 // pred_fallthru
          _
        // Predicated region
        $region57: #{tpu_custom_call.1} parent=11 // pred_check
          %p666 = pneg %p402
        $region58: #{tpu_custom_call.1} parent=11 // pred_check_branch
          %668 = sbr.rel (%p666) target = $region60
        $region59: #{tpu_custom_call.1} parent=11 // pred_region
          %s670 = ssub.s32 256, 256
          %671 = vsyncadd [#allocation31], %s670
          %s672 = sshll.u32 [#allocation30], 4
          %s673 = int_to_ptr.vmem [resolvable:$true] %s672
          %678 = dma.hbm_to_vmem [thread:$0]  %s15, 256, %s673, [#allocation31], 64, 64, 4
        $region60: #{tpu_custom_call.1} parent=11 // pred_fallthru
          _
        // Predicated region
        $region61: #{tpu_custom_call.1} parent=11 // pred_check
          %p679 = pneg %p423
        $region62: #{tpu_custom_call.1} parent=11 // pred_check_branch
          %681 = sbr.rel (%p679) target = $region64
        $region63: #{tpu_custom_call.1} parent=11 // pred_region
          %s683 = ssub.s32 128, 128
          %684 = vsyncadd [#allocation31], %s683
          %s685 = sshll.u32 [#allocation32], 4
          %s686 = int_to_ptr.vmem [resolvable:$true] %s685
          %691 = dma.hbm_to_vmem [thread:$0]  %s16, 128, %s686, [#allocation31], 64, 64, 4
        $region64: #{tpu_custom_call.1} parent=11 // pred_fallthru
          _
        // Predicated region
        $region65: #{tpu_custom_call.1} parent=11 // pred_check
          %p692 = pneg %p444
        $region66: #{tpu_custom_call.1} parent=11 // pred_check_branch
          %694 = sbr.rel (%p692) target = $region68
        $region67: #{tpu_custom_call.1} parent=11 // pred_region
          %s696 = ssub.s32 128, 128
          %697 = vsyncadd [#allocation34], %s696
          %s698 = sshll.u32 [#allocation33], 4
          %s699 = int_to_ptr.vmem [resolvable:$true] %s698
          %704 = dma.hbm_to_vmem [thread:$0]  %s17, 128, %s699, [#allocation34], 64, 64, 4
        $region68: #{tpu_custom_call.1} parent=11 // pred_fallthru
          _
        // Predicated region
        $region69: #{tpu_custom_call.1} parent=11 // pred_check
          %p705 = pneg %p465
        $region70: #{tpu_custom_call.1} parent=11 // pred_check_branch
          %707 = sbr.rel (%p705) target = $region72
        $region71: #{tpu_custom_call.1} parent=11 // pred_region
          %s709 = ssub.s32 512, 512
          %710 = vsyncadd [#allocation34], %s709
          %s711 = sshll.u32 [#allocation35], 4
          %s712 = int_to_ptr.vmem [resolvable:$true] %s711
          %717 = dma.hbm_to_vmem [thread:$0]  %s18, 512, %s712, [#allocation34], 64, 64, 4
        $region72: #{tpu_custom_call.1} parent=11 // pred_fallthru
          _
        // Predicated region
        $region73: #{tpu_custom_call.1} parent=11 // pred_check
          %p718 = pneg %p486
        $region74: #{tpu_custom_call.1} parent=11 // pred_check_branch
          %720 = sbr.rel (%p718) target = $region76
        $region75: #{tpu_custom_call.1} parent=11 // pred_region
          %s722 = ssub.s32 64, 64
          %723 = vsyncadd [#allocation37], %s722
          %s725 = sshll.u32 [#allocation36], 4
          %s726 = int_to_ptr.vmem [resolvable:$true] %s725
          %728 = dma.hbm_to_vmem [thread:$0]  %s19, 64, %s726, [#allocation37]
        $region76: #{tpu_custom_call.1} parent=11 // pred_fallthru
          _
      $region12: #{tpu_custom_call.1} parent=5 // pred_fallthru
        _
      %p729 = scmp.lt.s32.totalorder %s46, 2
      // Predicated region
      $region77: #{tpu_custom_call.1} parent=5 // pred_check
        %p730 = pneg %p729
      $region78: #{tpu_custom_call.1} parent=5 // pred_check_branch
        %732 = sbr.rel (%p730) target = $region80
      $region79: #{tpu_custom_call.1} parent=5 // pred_region
        // Predicated region
        $region81: #{tpu_custom_call.1} parent=79 // pred_check
          %p733 = pneg %p66
        $region82: #{tpu_custom_call.1} parent=79 // pred_check_branch
          %735 = sbr.rel (%p733) target = $region84
        $region83: #{tpu_custom_call.1} parent=79 // pred_region
          %s736 = sand.u32 %s56, 1
          %s737 = scalar_lea.sflag [#allocation7], %s736
          %s738 = sand.u32 %s56, 1
          %s739 = smul.addr %s738, 8
          %s740 = scalar_lea.vmem [#allocation6], %s739
          %s742 = ssub.s32 128, 128
          %743 = vsyncadd %s737, %s742
          %s744 = smul.addr %s46, 128
          %s745 = scalar_lea.hbm %s0, %s744
          %s747 = sshll.u32 %s740, 4
          %s748 = int_to_ptr.vmem [resolvable:$true] %s747
          %750 = dma.hbm_to_vmem [thread:$0]  %s745, 128, %s748, %s737
        $region84: #{tpu_custom_call.1} parent=79 // pred_fallthru
          _
        // Predicated region
        $region85: #{tpu_custom_call.1} parent=79 // pred_check
          %p751 = pneg %p92
        $region86: #{tpu_custom_call.1} parent=79 // pred_check_branch
          %753 = sbr.rel (%p751) target = $region88
        $region87: #{tpu_custom_call.1} parent=79 // pred_region
          %s754 = sand.u32 %s46, 1
          %s755 = scalar_lea.sflag [#allocation10], %s754
          %s756 = sand.u32 %s82, 1
          %s757 = smul.addr %s756, 8
          %s758 = scalar_lea.vmem [#allocation9], %s757
          %s760 = ssub.s32 128, 128
          %761 = vsyncadd %s755, %s760
          %s762 = smul.addr %s46, 128
          %s763 = scalar_lea.hbm %s1, %s762
          %s765 = sshll.u32 %s758, 4
          %s766 = int_to_ptr.vmem [resolvable:$true] %s765
          %768 = dma.hbm_to_vmem [thread:$0]  %s763, 128, %s766, %s755
        $region88: #{tpu_custom_call.1} parent=79 // pred_fallthru
          _
        // Predicated region
        $region89: #{tpu_custom_call.1} parent=79 // pred_check
          %p769 = pneg %p118
        $region90: #{tpu_custom_call.1} parent=79 // pred_check_branch
          %771 = sbr.rel (%p769) target = $region92
        $region91: #{tpu_custom_call.1} parent=79 // pred_region
          %s772 = sand.u32 %s46, 1
          %s773 = scalar_lea.sflag [#allocation10], %s772
          %s774 = sand.u32 %s108, 1
          %s775 = smul.addr %s774, 8
          %s776 = scalar_lea.vmem [#allocation11], %s775
          %s778 = ssub.s32 128, 128
          %779 = vsyncadd %s773, %s778
          %s780 = smul.addr %s46, 128
          %s781 = scalar_lea.hbm %s2, %s780
          %s783 = sshll.u32 %s776, 4
          %s784 = int_to_ptr.vmem [resolvable:$true] %s783
          %786 = dma.hbm_to_vmem [thread:$0]  %s781, 128, %s784, %s773
        $region92: #{tpu_custom_call.1} parent=79 // pred_fallthru
          _
        // Predicated region
        $region93: #{tpu_custom_call.1} parent=79 // pred_check
          %p787 = pneg %p144
        $region94: #{tpu_custom_call.1} parent=79 // pred_check_branch
          %789 = sbr.rel (%p787) target = $region96
        $region95: #{tpu_custom_call.1} parent=79 // pred_region
          %s790 = sand.u32 %s46, 1
          %s791 = scalar_lea.sflag [#allocation13], %s790
          %s792 = sand.u32 %s134, 1
          %s793 = smul.addr %s792, 8
          %s794 = scalar_lea.vmem [#allocation12], %s793
          %s796 = ssub.s32 128, 128
          %797 = vsyncadd %s791, %s796
          %s798 = smul.addr %s46, 128
          %s799 = scalar_lea.hbm %s3, %s798
          %s801 = sshll.u32 %s794, 4
          %s802 = int_to_ptr.vmem [resolvable:$true] %s801
          %804 = dma.hbm_to_vmem [thread:$0]  %s799, 128, %s802, %s791
        $region96: #{tpu_custom_call.1} parent=79 // pred_fallthru
          _
      $region80: #{tpu_custom_call.1} parent=5 // pred_fallthru
        _
      %p805 = scmp.le.s32.totalorder 1, %s46
      %p806 = scmp.lt.s32.totalorder %s46, 3
      %p807 = pnand %p805, %p806
      %p808 = pneg %p807
      // Predicated region
      $region97: #{tpu_custom_call.1} parent=5 // pred_check
        _
      $region98: #{tpu_custom_call.1} parent=5 // pred_check_branch
        %810 = sbr.rel (%p807) target = $region100
      $region99: #{tpu_custom_call.1} parent=5 // pred_region
        %s811 = ssub.s32 %s46, 1
        %s812 = sand.u32 %s59, 1
        %s813 = scalar_lea.sflag [#allocation7], %s812
        %s814 = sand.u32 %s59, 1
        %s815 = smul.addr %s814, 8
        %s816 = scalar_lea.vmem [#allocation6], %s815
        // Predicated region
        $region101: #{tpu_custom_call.1} parent=99 // pred_check
          %p817 = pneg %p72
        $region102: #{tpu_custom_call.1} parent=99 // pred_check_branch
          %819 = sbr.rel (%p817) target = $region104
        $region103: #{tpu_custom_call.1} parent=99 // pred_region
          %820 = dma.done %s813, 128
        $region104: #{tpu_custom_call.1} parent=99 // pred_fallthru
          _
        %s821 = sand.u32 %s51, 1
        %s822 = scalar_lea.sflag [#allocation10], %s821
        %s823 = sand.u32 %s85, 1
        %s824 = smul.addr %s823, 8
        %s825 = scalar_lea.vmem [#allocation9], %s824
        // Predicated region
        $region105: #{tpu_custom_call.1} parent=99 // pred_check
          %p826 = pneg %p98
        $region106: #{tpu_custom_call.1} parent=99 // pred_check_branch
          %828 = sbr.rel (%p826) target = $region108
        $region107: #{tpu_custom_call.1} parent=99 // pred_region
          %829 = dma.done %s822, 128
        $region108: #{tpu_custom_call.1} parent=99 // pred_fallthru
          _
        %s830 = sand.u32 %s51, 1
        %s831 = scalar_lea.sflag [#allocation10], %s830
        %s832 = sand.u32 %s111, 1
        %s833 = smul.addr %s832, 8
        %s834 = scalar_lea.vmem [#allocation11], %s833
        // Predicated region
        $region109: #{tpu_custom_call.1} parent=99 // pred_check
          %p835 = pneg %p124
        $region110: #{tpu_custom_call.1} parent=99 // pred_check_branch
          %837 = sbr.rel (%p835) target = $region112
        $region111: #{tpu_custom_call.1} parent=99 // pred_region
          %838 = dma.done %s831, 128
        $region112: #{tpu_custom_call.1} parent=99 // pred_fallthru
          _
        %s839 = sand.u32 %s51, 1
        %s840 = scalar_lea.sflag [#allocation13], %s839
        %s841 = sand.u32 %s137, 1
        %s842 = smul.addr %s841, 8
        %s843 = scalar_lea.vmem [#allocation12], %s842
        // Predicated region
        $region113: #{tpu_custom_call.1} parent=99 // pred_check
          %p844 = pneg %p150
        $region114: #{tpu_custom_call.1} parent=99 // pred_check_branch
          %846 = sbr.rel (%p844) target = $region116
        $region115: #{tpu_custom_call.1} parent=99 // pred_region
          %847 = dma.done %s840, 128
        $region116: #{tpu_custom_call.1} parent=99 // pred_fallthru
          _
        // Predicated region
        $region117: #{tpu_custom_call.1} parent=99 // pred_check
          %p848 = pneg %p171
        $region118: #{tpu_custom_call.1} parent=99 // pred_check_branch
          %850 = sbr.rel (%p848) target = $region120
        $region119: #{tpu_custom_call.1} parent=99 // pred_region
          %851 = dma.done [#allocation13], 64
        $region120: #{tpu_custom_call.1} parent=99 // pred_fallthru
          _
        // Predicated region
        $region121: #{tpu_custom_call.1} parent=99 // pred_check
          %p852 = pneg %p192
        $region122: #{tpu_custom_call.1} parent=99 // pred_check_branch
          %854 = sbr.rel (%p852) target = $region124
        $region123: #{tpu_custom_call.1} parent=99 // pred_region
          %855 = dma.done [#allocation16], 1024
        $region124: #{tpu_custom_call.1} parent=99 // pred_fallthru
          _
        // Predicated region
        $region125: #{tpu_custom_call.1} parent=99 // pred_check
          %p856 = pneg %p213
        $region126: #{tpu_custom_call.1} parent=99 // pred_check_branch
          %858 = sbr.rel (%p856) target = $region128
        $region127: #{tpu_custom_call.1} parent=99 // pred_region
          %859 = dma.done [#allocation16], 256
        $region128: #{tpu_custom_call.1} parent=99 // pred_fallthru
          _
        // Predicated region
        $region129: #{tpu_custom_call.1} parent=99 // pred_check
          %p860 = pneg %p234
        $region130: #{tpu_custom_call.1} parent=99 // pred_check_branch
          %862 = sbr.rel (%p860) target = $region132
        $region131: #{tpu_custom_call.1} parent=99 // pred_region
          %863 = dma.done [#allocation19], 256
        $region132: #{tpu_custom_call.1} parent=99 // pred_fallthru
          _
        // Predicated region
        $region133: #{tpu_custom_call.1} parent=99 // pred_check
          %p864 = pneg %p255
        $region134: #{tpu_custom_call.1} parent=99 // pred_check_branch
          %866 = sbr.rel (%p864) target = $region136
        $region135: #{tpu_custom_call.1} parent=99 // pred_region
          %867 = dma.done [#allocation19], 256
        $region136: #{tpu_custom_call.1} parent=99 // pred_fallthru
          _
        // Predicated region
        $region137: #{tpu_custom_call.1} parent=99 // pred_check
          %p868 = pneg %p276
        $region138: #{tpu_custom_call.1} parent=99 // pred_check_branch
          %870 = sbr.rel (%p868) target = $region140
        $region139: #{tpu_custom_call.1} parent=99 // pred_region
          %871 = dma.done [#allocation22], 256
        $region140: #{tpu_custom_call.1} parent=99 // pred_fallthru
          _
        // Predicated region
        $region141: #{tpu_custom_call.1} parent=99 // pred_check
          %p872 = pneg %p297
        $region142: #{tpu_custom_call.1} parent=99 // pred_check_branch
          %874 = sbr.rel (%p872) target = $region144
        $region143: #{tpu_custom_call.1} parent=99 // pred_region
          %875 = dma.done [#allocation22], 256
        $region144: #{tpu_custom_call.1} parent=99 // pred_fallthru
          _
        // Predicated region
        $region145: #{tpu_custom_call.1} parent=99 // pred_check
          %p876 = pneg %p318
        $region146: #{tpu_custom_call.1} parent=99 // pred_check_branch
          %878 = sbr.rel (%p876) target = $region148
        $region147: #{tpu_custom_call.1} parent=99 // pred_region
          %879 = dma.done [#allocation25], 256
        $region148: #{tpu_custom_call.1} parent=99 // pred_fallthru
          _
        // Predicated region
        $region149: #{tpu_custom_call.1} parent=99 // pred_check
          %p880 = pneg %p339
        $region150: #{tpu_custom_call.1} parent=99 // pred_check_branch
          %882 = sbr.rel (%p880) target = $region152
        $region151: #{tpu_custom_call.1} parent=99 // pred_region
          %883 = dma.done [#allocation25], 64
        $region152: #{tpu_custom_call.1} parent=99 // pred_fallthru
          _
        // Predicated region
        $region153: #{tpu_custom_call.1} parent=99 // pred_check
          %p884 = pneg %p360
        $region154: #{tpu_custom_call.1} parent=99 // pred_check_branch
          %886 = sbr.rel (%p884) target = $region156
        $region155: #{tpu_custom_call.1} parent=99 // pred_region
          %887 = dma.done [#allocation28], 256
        $region156: #{tpu_custom_call.1} parent=99 // pred_fallthru
          _
        // Predicated region
        $region157: #{tpu_custom_call.1} parent=99 // pred_check
          %p888 = pneg %p381
        $region158: #{tpu_custom_call.1} parent=99 // pred_check_branch
          %890 = sbr.rel (%p888) target = $region160
        $region159: #{tpu_custom_call.1} parent=99 // pred_region
          %891 = dma.done [#allocation28], 512
        $region160: #{tpu_custom_call.1} parent=99 // pred_fallthru
          _
        // Predicated region
        $region161: #{tpu_custom_call.1} parent=99 // pred_check
          %p892 = pneg %p402
        $region162: #{tpu_custom_call.1} parent=99 // pred_check_branch
          %894 = sbr.rel (%p892) target = $region164
        $region163: #{tpu_custom_call.1} parent=99 // pred_region
          %895 = dma.done [#allocation31], 256
        $region164: #{tpu_custom_call.1} parent=99 // pred_fallthru
          _
        // Predicated region
        $region165: #{tpu_custom_call.1} parent=99 // pred_check
          %p896 = pneg %p423
        $region166: #{tpu_custom_call.1} parent=99 // pred_check_branch
          %898 = sbr.rel (%p896) target = $region168
        $region167: #{tpu_custom_call.1} parent=99 // pred_region
          %899 = dma.done [#allocation31], 128
        $region168: #{tpu_custom_call.1} parent=99 // pred_fallthru
          _
        // Predicated region
        $region169: #{tpu_custom_call.1} parent=99 // pred_check
          %p900 = pneg %p444
        $region170: #{tpu_custom_call.1} parent=99 // pred_check_branch
          %902 = sbr.rel (%p900) target = $region172
        $region171: #{tpu_custom_call.1} parent=99 // pred_region
          %903 = dma.done [#allocation34], 128
        $region172: #{tpu_custom_call.1} parent=99 // pred_fallthru
          _
        // Predicated region
        $region173: #{tpu_custom_call.1} parent=99 // pred_check
          %p904 = pneg %p465
        $region174: #{tpu_custom_call.1} parent=99 // pred_check_branch
          %906 = sbr.rel (%p904) target = $region176
        $region175: #{tpu_custom_call.1} parent=99 // pred_region
          %907 = dma.done [#allocation34], 512
        $region176: #{tpu_custom_call.1} parent=99 // pred_fallthru
          _
        // Predicated region
        $region177: #{tpu_custom_call.1} parent=99 // pred_check
          %p908 = pneg %p486
        $region178: #{tpu_custom_call.1} parent=99 // pred_check_branch
          %910 = sbr.rel (%p908) target = $region180
        $region179: #{tpu_custom_call.1} parent=99 // pred_region
          %911 = dma.done [#allocation37], 64
        $region180: #{tpu_custom_call.1} parent=99 // pred_fallthru
          _
        %s912 = sand.u32 %s59, 1
        %s913 = scalar_lea.sflag [#allocation7], %s912
        %s914 = sand.u32 %s59, 1
        %s915 = smul.addr %s914, 8
        %s916 = scalar_lea.vmem [#allocation6], %s915
        %p917 = pneg %p72
        %p918 = pneg %p69
        %s919 = sand.u32 %s51, 1
        %s920 = scalar_lea.sflag [#allocation10], %s919
        %s921 = sand.u32 %s85, 1
        %s922 = smul.addr %s921, 8
        %s923 = scalar_lea.vmem [#allocation9], %s922
        %p924 = pneg %p98
        %p925 = pneg %p95
        %s926 = sand.u32 %s51, 1
        %s927 = scalar_lea.sflag [#allocation10], %s926
        %s928 = sand.u32 %s111, 1
        %s929 = smul.addr %s928, 8
        %s930 = scalar_lea.vmem [#allocation11], %s929
        %p931 = pneg %p124
        %p932 = pneg %p121
        %s933 = sand.u32 %s51, 1
        %s934 = scalar_lea.sflag [#allocation13], %s933
        %s935 = sand.u32 %s137, 1
        %s936 = smul.addr %s935, 8
        %s937 = scalar_lea.vmem [#allocation12], %s936
        %p938 = pneg %p150
        %p939 = pneg %p147
        %p940 = pneg %p171
        %p941 = pneg %p168
        %p942 = pneg %p192
        %p943 = pneg %p189
        %p944 = pneg %p213
        %p945 = pneg %p210
        %p946 = pneg %p234
        %p947 = pneg %p231
        %p948 = pneg %p255
        %p949 = pneg %p252
        %p950 = pneg %p276
        %p951 = pneg %p273
        %p952 = pneg %p297
        %p953 = pneg %p294
        %p954 = pneg %p318
        %p955 = pneg %p315
        %p956 = pneg %p339
        %p957 = pneg %p336
        %p958 = pneg %p360
        %p959 = pneg %p357
        %p960 = pneg %p381
        %p961 = pneg %p378
        %p962 = pneg %p402
        %p963 = pneg %p399
        %p964 = pneg %p423
        %p965 = pneg %p420
        %p966 = pneg %p444
        %p967 = pneg %p441
        %p968 = pneg %p465
        %p969 = pneg %p462
        %p970 = pneg %p486
        %p971 = pneg %p483
        %p972 = pneg %p512
        %p973 = pneg %p509
        %s974 = sand.u32 %s499, 1
        %s975 = scalar_lea.sflag [#allocation8], %s974
        %s976 = sand.u32 %s499, 1
        %s977 = smul.addr %s976, 8
        %s978 = scalar_lea.vmem [#allocation38], %s977
        %v980 = vld [vmem:[%s816] sm:$0xff]
        %v981 = vld [vmem:[%s834] sm:$0xff]
        %v982 = vld [vmem:[%s843] sm:$0xff]
        %v983 = vld [vmem:[%s825] sm:$0xff]
        %vm984 = vcmp.gt.f32.partialorder %v983, 0.5
        %v985 = vsel %vm984, 1, 0
        %986 = vset.pattern.permute.xlu0 0
        %987 = vperm.xlu0 %986, %v985
        %v988 = vpop.permute.xlu0 %987
        %vm989 = vcmp.eq.s32.totalorder %v988, 1
        %v990 = vld [vmem:[#allocation14 + $0x1] sm:$0x1]
        %v991 = vmul.f32 %v980, %v980
        %vm992 = vcmask 261120
        %v993 = vsel %vm992, %v991, 0.0
        %994 = vadd.xlane.f32.xlu0 %v993
        %v995 = vpop.xlane.xlu0 %994
        %v996 = vrcp.pop 32.0
        %v997 = vmul.f32 %v995, %v996
        %v998 = vadd.f32 %v997, 1e-06
        %v999 = vrsqrt.pop %v998
        %v1000 = vmul.f32 %v980, %v999
        %v1001 = vlaneseq
        %v1002 = vshrl.u32 %v1001, 7
        %v1003 = vsub.s32 0, %v1002
        %v1004 = vrot.slane %v990, %v1003
        %v1005 = vmul.f32 %v1000, %v1004
        %v1006 = vld [vmem:[#allocation14] sm:$0x1]
        %v1007 = vlaneseq
        %v1008 = vshrl.u32 %v1007, 7
        %v1009 = vsub.s32 0, %v1008
        %v1010 = vrot.slane %v1006, %v1009
        %v1011 = vmul.f32 %v1000, %v1010
        %v1012 = vsel %vm989, %v1005, %v1011
        %v1013 = vpack.c.bf16 %v1012, %v1012
        %v1014 = vld [vmem:[#allocation18] sm:$0xf]
        %v1015 = vld [vmem:[#allocation18 + $0x4] sm:$0xf]
        %v1016 = vld [vmem:[#allocation18 + $0x8] sm:$0xf]
        %v1017 = vld [vmem:[#allocation18 + $0xc] sm:$0xf]
        %v1022 = vunpack.c.l.b16 %v1014
        %v1023 = vunpack.c.l.b16 %v1015
        %v1024 = vunpack.c.l.b16 %v1016
        %v1025 = vunpack.c.l.b16 %v1017
        %v1026 = vpack.c.b16 %v1023, %v1022
        %v1027 = vpack.c.b16 %v1025, %v1024
        %v1031 = vsel %vm992, %v1013, 0
        %1033 = vmatprep.subr.bf16.mxu0 0
        %1034 = vmatpush1.bf16.msra.mxu0 %v1026
        %1035 = vmatprep.subr.bf16.mxu0 0
        %1036 = vmatpush1.bf16.msra.mxu0 %v1027
        %1037 = vmatprep.subr.bf16.mxu0 0
        %1038 = vmatpush1.bf16.msra.mxu0 0
        %1039 = vmatprep.subr.bf16.mxu0 0
        %1040 = vmatpush1.bf16.msra.mxu0 0
        %1041 = vmatprep.subr.bf16.mxu0 0
        %1042 = vmatpush1.bf16.msra.mxu0 0
        %1043 = vmatprep.subr.bf16.mxu0 0
        %1044 = vmatpush1.bf16.msra.mxu0 0
        %1045 = vmatprep.subr.bf16.mxu0 0
        %1046 = vmatpush1.bf16.msra.mxu0 0
        %1047 = vmatprep.subr.bf16.mxu0 0
        %1048 = vmatpush1.bf16.msra.mxu0 0
        %1049 = vmatprep.subr.bf16.mxu0 0
        %1050 = vmatpush1.bf16.msra.mxu0 0
        %1051 = vmatprep.subr.bf16.mxu0 0
        %1052 = vmatpush1.bf16.msra.mxu0 0
        %1053 = vmatprep.subr.bf16.mxu0 0
        %1054 = vmatpush1.bf16.msra.mxu0 0
        %1055 = vmatprep.subr.bf16.mxu0 0
        %1056 = vmatpush1.bf16.msra.mxu0 0
        %1057 = vmatprep.subr.bf16.mxu0 0
        %1058 = vmatpush1.bf16.msra.mxu0 0
        %1059 = vmatprep.subr.bf16.mxu0 0
        %1060 = vmatpush1.bf16.msra.mxu0 0
        %1061 = vmatprep.subr.bf16.mxu0 0
        %1062 = vmatpush1.bf16.msra.mxu0 0
        %1063 = vmatprep.subr.bf16.mxu0 0
        %1064 = vmatpush1.bf16.msra.mxu0 0
        %1065 = vmatprep.mubr.bf16.mxu0 0
        %1066 = vmatmul.mubr.bf16.gmra.mrb[0].mxu0 %v1031
        %v1067 = vpop.f32.mrb[0].mxu0
        %v1068 = vadd.f32 0.0, %v1067
        %v1069 = vpop.f32.mrb[0].mxu0
        %v1070 = vpop.f32.mrb[0].mxu0
        %v1071 = vpop.f32.mrb[0].mxu0
        %1072 = vdwg.mxu0
        %v1073 = vpack.c.bf16 %v1068, %v1068
        %1074 = vst.msk [vmem:[#allocation4] sm:$0xff] %vm992, 0.0
        %vm1075 = vcmask 64512
        %1076 = vst.msk [vmem:[#allocation5] sm:$0xff] %vm1075, 0.0
        %v1077 = vlaneseq
        %v1078 = vshrl.u32 %v1077, 7
        %v1079 = vlaneseq
        %v1080 = vand.u32 %v1079, 127
        loop: start=0, step=1, limit=4
        $region181: #{tpu_custom_call.1} parent=99 // loop_pre_header
          _
        $region182: #{tpu_custom_call.1} parent=99 // loop_header
          %s1082 = sphi 0, %s1086
          %p1083 = scmp.ge.s32.totalorder %s1082, 4
        $region183: #{tpu_custom_call.1} parent=99 // loop_header_branch
          %1085 = sbr.rel (%p1083) target = $region187
        $region184: #{tpu_custom_call.1} parent=99 // loop_body
          %s1087 = smul.u32 %s1082, 4
          %s1088 = smul.addr %s1087, 4
          %s1089 = scalar_lea.vmem [#allocation15], %s1088
          %v1090 = vld [vmem:[%s1089] sm:$0xf]
          %v1091 = vld [vmem:[%s1089 + $0x4] sm:$0xf]
          %v1092 = vld [vmem:[%s1089 + $0x8] sm:$0xf]
          %v1093 = vld [vmem:[%s1089 + $0xc] sm:$0xf]
          %v1098 = vunpack.c.l.b16 %v1090
          %v1099 = vunpack.c.l.b16 %v1091
          %v1100 = vunpack.c.l.b16 %v1092
          %v1101 = vunpack.c.l.b16 %v1093
          %v1102 = vpack.c.b16 %v1099, %v1098
          %v1103 = vpack.c.b16 %v1101, %v1100
          %1106 = vmatprep.subr.bf16.mxu0 0
          %1107 = vmatpush1.bf16.msra.mxu0 %v1102
          %1108 = vmatprep.subr.bf16.mxu0 0
          %1109 = vmatpush1.bf16.msra.mxu0 %v1103
          %1110 = vmatprep.subr.bf16.mxu0 0
          %1111 = vmatpush1.bf16.msra.mxu0 0
          %1112 = vmatprep.subr.bf16.mxu0 0
          %1113 = vmatpush1.bf16.msra.mxu0 0
          %1114 = vmatprep.subr.bf16.mxu0 0
          %1115 = vmatpush1.bf16.msra.mxu0 0
          %1116 = vmatprep.subr.bf16.mxu0 0
          %1117 = vmatpush1.bf16.msra.mxu0 0
          %1118 = vmatprep.subr.bf16.mxu0 0
          %1119 = vmatpush1.bf16.msra.mxu0 0
          %1120 = vmatprep.subr.bf16.mxu0 0
          %1121 = vmatpush1.bf16.msra.mxu0 0
          %1122 = vmatprep.subr.bf16.mxu0 0
          %1123 = vmatpush1.bf16.msra.mxu0 0
          %1124 = vmatprep.subr.bf16.mxu0 0
          %1125 = vmatpush1.bf16.msra.mxu0 0
          %1126 = vmatprep.subr.bf16.mxu0 0
          %1127 = vmatpush1.bf16.msra.mxu0 0
          %1128 = vmatprep.subr.bf16.mxu0 0
          %1129 = vmatpush1.bf16.msra.mxu0 0
          %1130 = vmatprep.subr.bf16.mxu0 0
          %1131 = vmatpush1.bf16.msra.mxu0 0
          %1132 = vmatprep.subr.bf16.mxu0 0
          %1133 = vmatpush1.bf16.msra.mxu0 0
          %1134 = vmatprep.subr.bf16.mxu0 0
          %1135 = vmatpush1.bf16.msra.mxu0 0
          %1136 = vmatprep.subr.bf16.mxu0 0
          %1137 = vmatpush1.bf16.msra.mxu0 0
          %1138 = vmatprep.mubr.bf16.mxu0 0
          %1139 = vmatmul.mubr.bf16.gmra.mrb[0].mxu0 %v1031
          %v1140 = vpop.f32.mrb[0].mxu0
          %v1141 = vadd.f32 0.0, %v1140
          %v1142 = vpop.f32.mrb[0].mxu0
          %v1143 = vpop.f32.mrb[0].mxu0
          %v1144 = vpop.f32.mrb[0].mxu0
          %1145 = vdwg.mxu0
          %s1146 = smul.addr %s1082, 4
          %s1147 = scalar_lea.vmem [#allocation20], %s1146
          %v1148 = vld [vmem:[%s1147] sm:$0xf]
          %v1150 = vsel %vm1075, %v1073, 0
          %vm1152 = vcmask 1043456
          %v1154 = vsel %vm1152, %v1148, 0
          %1156 = vmatprep.subr.bf16.mxu0 0
          %1157 = vmatpush1.bf16.msra.mxu0 %v1154
          %1158 = vmatprep.subr.bf16.mxu0 0
          %1159 = vmatpush1.bf16.msra.mxu0 0
          %1160 = vmatprep.subr.bf16.mxu0 0
          %1161 = vmatpush1.bf16.msra.mxu0 0
          %1162 = vmatprep.subr.bf16.mxu0 0
          %1163 = vmatpush1.bf16.msra.mxu0 0
          %1164 = vmatprep.subr.bf16.mxu0 0
          %1165 = vmatpush1.bf16.msra.mxu0 0
          %1166 = vmatprep.subr.bf16.mxu0 0
          %1167 = vmatpush1.bf16.msra.mxu0 0
          %1168 = vmatprep.subr.bf16.mxu0 0
          %1169 = vmatpush1.bf16.msra.mxu0 0
          %1170 = vmatprep.subr.bf16.mxu0 0
          %1171 = vmatpush1.bf16.msra.mxu0 0
          %1172 = vmatprep.subr.bf16.mxu0 0
          %1173 = vmatpush1.bf16.msra.mxu0 0
          %1174 = vmatprep.subr.bf16.mxu0 0
          %1175 = vmatpush1.bf16.msra.mxu0 0
          %1176 = vmatprep.subr.bf16.mxu0 0
          %1177 = vmatpush1.bf16.msra.mxu0 0
          %1178 = vmatprep.subr.bf16.mxu0 0
          %1179 = vmatpush1.bf16.msra.mxu0 0
          %1180 = vmatprep.subr.bf16.mxu0 0
          %1181 = vmatpush1.bf16.msra.mxu0 0
          %1182 = vmatprep.subr.bf16.mxu0 0
          %1183 = vmatpush1.bf16.msra.mxu0 0
          %1184 = vmatprep.subr.bf16.mxu0 0
          %1185 = vmatpush1.bf16.msra.mxu0 0
          %1186 = vmatprep.subr.bf16.mxu0 0
          %1187 = vmatpush1.bf16.msra.mxu0 0
          %1188 = vmatprep.mubr.bf16.mxu0 0
          %1189 = vmatmul.mubr.bf16.gmra.mrb[0].mxu0 %v1150
          %v1190 = vpop.f32.mrb[0].mxu0
          %v1191 = vadd.f32 0.0, %v1190
          %v1192 = vpop.f32.mrb[0].mxu0
          %v1193 = vpop.f32.mrb[0].mxu0
          %v1194 = vpop.f32.mrb[0].mxu0
          %1195 = vdwg.mxu0
          %s1196 = smul.addr %s1082, 4
          %s1197 = scalar_lea.vmem [#allocation21], %s1196
          %v1198 = vld [vmem:[%s1197] sm:$0xf]
          %1200 = vrot.lane.b32.xlu0 %v1073, 120
          %v1201 = vpop.permute.xlu0 %1200
          %v1203 = vsel %vm1075, %v1201, 0
          %v1206 = vsel %vm1152, %v1198, 0
          %1208 = vmatprep.subr.bf16.mxu0 0
          %1209 = vmatpush1.bf16.msra.mxu0 %v1206
          %1210 = vmatprep.subr.bf16.mxu0 0
          %1211 = vmatpush1.bf16.msra.mxu0 0
          %1212 = vmatprep.subr.bf16.mxu0 0
          %1213 = vmatpush1.bf16.msra.mxu0 0
          %1214 = vmatprep.subr.bf16.mxu0 0
          %1215 = vmatpush1.bf16.msra.mxu0 0
          %1216 = vmatprep.subr.bf16.mxu0 0
          %1217 = vmatpush1.bf16.msra.mxu0 0
          %1218 = vmatprep.subr.bf16.mxu0 0
          %1219 = vmatpush1.bf16.msra.mxu0 0
          %1220 = vmatprep.subr.bf16.mxu0 0
          %1221 = vmatpush1.bf16.msra.mxu0 0
          %1222 = vmatprep.subr.bf16.mxu0 0
          %1223 = vmatpush1.bf16.msra.mxu0 0
          %1224 = vmatprep.subr.bf16.mxu0 0
          %1225 = vmatpush1.bf16.msra.mxu0 0
          %1226 = vmatprep.subr.bf16.mxu0 0
          %1227 = vmatpush1.bf16.msra.mxu0 0
          %1228 = vmatprep.subr.bf16.mxu0 0
          %1229 = vmatpush1.bf16.msra.mxu0 0
          %1230 = vmatprep.subr.bf16.mxu0 0
          %1231 = vmatpush1.bf16.msra.mxu0 0
          %1232 = vmatprep.subr.bf16.mxu0 0
          %1233 = vmatpush1.bf16.msra.mxu0 0
          %1234 = vmatprep.subr.bf16.mxu0 0
          %1235 = vmatpush1.bf16.msra.mxu0 0
          %1236 = vmatprep.subr.bf16.mxu0 0
          %1237 = vmatpush1.bf16.msra.mxu0 0
          %1238 = vmatprep.subr.bf16.mxu0 0
          %1239 = vmatpush1.bf16.msra.mxu0 0
          %1240 = vmatprep.mubr.bf16.mxu0 0
          %1241 = vmatmul.mubr.bf16.gmra.mrb[0].mxu0 %v1203
          %v1242 = vpop.f32.mrb[0].mxu0
          %v1243 = vadd.f32 0.0, %v1242
          %v1244 = vpop.f32.mrb[0].mxu0
          %v1245 = vpop.f32.mrb[0].mxu0
          %v1246 = vpop.f32.mrb[0].mxu0
          %1247 = vdwg.mxu0
          %s1248 = smul.addr %s1082, 4
          %s1249 = scalar_lea.vmem [#allocation23], %s1248
          %v1250 = vld [vmem:[%s1249] sm:$0xf]
          %1251 = vrot.lane.b32.xlu0 %v1073, 112
          %v1252 = vpop.permute.xlu0 %1251
          %v1254 = vsel %vm1075, %v1252, 0
          %v1257 = vsel %vm1152, %v1250, 0
          %1259 = vmatprep.subr.bf16.mxu0 0
          %1260 = vmatpush1.bf16.msra.mxu0 %v1257
          %1261 = vmatprep.subr.bf16.mxu0 0
          %1262 = vmatpush1.bf16.msra.mxu0 0
          %1263 = vmatprep.subr.bf16.mxu0 0
          %1264 = vmatpush1.bf16.msra.mxu0 0
          %1265 = vmatprep.subr.bf16.mxu0 0
          %1266 = vmatpush1.bf16.msra.mxu0 0
          %1267 = vmatprep.subr.bf16.mxu0 0
          %1268 = vmatpush1.bf16.msra.mxu0 0
          %1269 = vmatprep.subr.bf16.mxu0 0
          %1270 = vmatpush1.bf16.msra.mxu0 0
          %1271 = vmatprep.subr.bf16.mxu0 0
          %1272 = vmatpush1.bf16.msra.mxu0 0
          %1273 = vmatprep.subr.bf16.mxu0 0
          %1274 = vmatpush1.bf16.msra.mxu0 0
          %1275 = vmatprep.subr.bf16.mxu0 0
          %1276 = vmatpush1.bf16.msra.mxu0 0
          %1277 = vmatprep.subr.bf16.mxu0 0
          %1278 = vmatpush1.bf16.msra.mxu0 0
          %1279 = vmatprep.subr.bf16.mxu0 0
          %1280 = vmatpush1.bf16.msra.mxu0 0
          %1281 = vmatprep.subr.bf16.mxu0 0
          %1282 = vmatpush1.bf16.msra.mxu0 0
          %1283 = vmatprep.subr.bf16.mxu0 0
          %1284 = vmatpush1.bf16.msra.mxu0 0
          %1285 = vmatprep.subr.bf16.mxu0 0
          %1286 = vmatpush1.bf16.msra.mxu0 0
          %1287 = vmatprep.subr.bf16.mxu0 0
          %1288 = vmatpush1.bf16.msra.mxu0 0
          %1289 = vmatprep.subr.bf16.mxu0 0
          %1290 = vmatpush1.bf16.msra.mxu0 0
          %1291 = vmatprep.mubr.bf16.mxu0 0
          %1292 = vmatmul.mubr.bf16.gmra.mrb[0].mxu0 %v1254
          %v1293 = vpop.f32.mrb[0].mxu0
          %v1294 = vadd.f32 0.0, %v1293
          %v1295 = vpop.f32.mrb[0].mxu0
          %v1296 = vpop.f32.mrb[0].mxu0
          %v1297 = vpop.f32.mrb[0].mxu0
          %1298 = vdwg.mxu0
          %v1299 = vsel %vm989, %v1191, %v1141
          %1301 = vrot.lane.b32.xlu0 %v1141, 120
          %v1302 = vpop.permute.xlu0 %1301
          %v1304 = vsel %vm989, %v1243, %v1302
          %1305 = vrot.lane.b32.xlu0 %v1141, 112
          %v1306 = vpop.permute.xlu0 %1305
          %v1308 = vsel %vm989, %v1294, %v1306
          %v1309 = vmul.f32 %v1299, %v981
          %1311 = vrot.lane.b32.xlu0 %v1299, 124
          %v1312 = vpop.permute.xlu0 %1311
          %1314 = vrot.lane.b32.xlu0 %v1299, 4
          %v1315 = vpop.permute.xlu0 %1314
          %vm1317 = vcmask 31744
          %v1318 = vsel %vm1317, %v1312, %v1315
          %v1319 = vmul.f32 %v1318, %v982
          %v1320 = vadd.f32 %v1309, %v1319
          %v1321 = vpack.c.bf16 %v1320, %v1320
          %v1322 = vmul.f32 %v1304, %v981
          %1324 = vrot.lane.b32.xlu0 %v1304, 124
          %v1325 = vpop.permute.xlu0 %1324
          %1327 = vrot.lane.b32.xlu0 %v1304, 4
          %v1328 = vpop.permute.xlu0 %1327
          %v1330 = vsel %vm1317, %v1325, %v1328
          %v1331 = vmul.f32 %v1330, %v982
          %v1332 = vadd.f32 %v1322, %v1331
          %v1333 = vpack.c.bf16 %v1332, %v1332
          %vm1334 = vcmask 60416
          %1335 = vst.msk [vmem:[#allocation2] sm:$0xf] %vm1334, %v1333
          %v1336 = vpack.c.bf16 %v1308, %v1308
          %1337 = vst.msk [vmem:[#allocation3] sm:$0xf] %vm1334, %v1336
          %v1338 = vld [vmem:[#allocation2] sm:$0xf]
          %v1339 = vld [vmem:[#allocation3] sm:$0xf]
          %v1341 = vsel %vm1075, %v1321, 0
          %v1344 = vsel %vm1075, %v1338, 0
          %1346 = vmatprep.subr.bf16.mxu0 0
          %1347 = vmatpush1.bf16.xpose.msra.mxu0 %v1344
          %1348 = vmatprep.subr.bf16.mxu0 0
          %1349 = vmatpush1.bf16.xpose.msra.mxu0 0
          %1350 = vmatprep.subr.bf16.mxu0 0
          %1351 = vmatpush1.bf16.xpose.msra.mxu0 0
          %1352 = vmatprep.subr.bf16.mxu0 0
          %1353 = vmatpush1.bf16.xpose.msra.mxu0 0
          %1354 = vmatprep.subr.bf16.mxu0 0
          %1355 = vmatpush1.bf16.xpose.msra.mxu0 0
          %1356 = vmatprep.subr.bf16.mxu0 0
          %1357 = vmatpush1.bf16.xpose.msra.mxu0 0
          %1358 = vmatprep.subr.bf16.mxu0 0
          %1359 = vmatpush1.bf16.xpose.msra.mxu0 0
          %1360 = vmatprep.subr.bf16.mxu0 0
          %1361 = vmatpush1.bf16.xpose.msra.mxu0 0
          %1362 = vmatprep.subr.bf16.mxu0 0
          %1363 = vmatpush1.bf16.xpose.msra.mxu0 0
          %1364 = vmatprep.subr.bf16.mxu0 0
          %1365 = vmatpush1.bf16.xpose.msra.mxu0 0
          %1366 = vmatprep.subr.bf16.mxu0 0
          %1367 = vmatpush1.bf16.xpose.msra.mxu0 0
          %1368 = vmatprep.subr.bf16.mxu0 0
          %1369 = vmatpush1.bf16.xpose.msra.mxu0 0
          %1370 = vmatprep.subr.bf16.mxu0 0
          %1371 = vmatpush1.bf16.xpose.msra.mxu0 0
          %1372 = vmatprep.subr.bf16.mxu0 0
          %1373 = vmatpush1.bf16.xpose.msra.mxu0 0
          %1374 = vmatprep.subr.bf16.mxu0 0
          %1375 = vmatpush1.bf16.xpose.msra.mxu0 0
          %1376 = vmatprep.subr.bf16.mxu0 0
          %1377 = vmatpush1.bf16.xpose.msra.mxu0 0
          %1378 = vmatprep.mubr.bf16.mxu0 0
          %1379 = vmatmul.mubr.bf16.gmra.mrb[0].mxu0 %v1341
          %v1380 = vpop.f32.mrb[0].mxu0
          %v1381 = vadd.f32 0.0, %v1380
          %v1382 = vpop.f32.mrb[0].mxu0
          %v1383 = vpop.f32.mrb[0].mxu0
          %v1384 = vpop.f32.mrb[0].mxu0
          %1385 = vdwg.mxu0
          %v1386 = vmul.f32 %v1381, 0.35355338
          %v1387 = vstv 0
          %v1388 = vadd.s32 %v1387, %v1080
          %vm1389 = vcmp.le.s32.totalorder %v1388, %v1078
          %v1390 = vsel %vm1389, %v1386, -3.4028235e+38
          %v1391 = vsel %vm1075, %v1390, -inf
          %1392 = vmax.xlane.f32.xlu0 %v1391
          %v1393 = vpop.xlane.xlu0 %1392
          %v1394 = vsub.f32 -inf, %v1393
          %v1395 = vmul.f32 %v1394, 1.442695
          %v1396 = vpow.pop %v1395
          %v1397 = vsub.f32 %v1390, %v1393
          %v1398 = vmul.f32 %v1397, 1.442695
          %v1399 = vpow.pop %v1398
          %v1400 = vmul.f32 %v1396, 0.0
          %v1401 = vsel %vm1075, %v1399, 0.0
          %1402 = vadd.xlane.f32.xlu0 %v1401
          %v1403 = vpop.xlane.xlu0 %1402
          %v1404 = vadd.f32 %v1400, %v1403
          %v1405 = vpack.c.bf16 %v1399, %v1399
          %v1407 = vsel %vm1075, %v1405, 0
          %v1410 = vsel %vm1152, %v1339, 0
          %1412 = vmatprep.subr.bf16.mxu0 0
          %1413 = vmatpush1.bf16.msra.mxu0 %v1410
          %1414 = vmatprep.subr.bf16.mxu0 0
          %1415 = vmatpush1.bf16.msra.mxu0 0
          %1416 = vmatprep.subr.bf16.mxu0 0
          %1417 = vmatpush1.bf16.msra.mxu0 0
          %1418 = vmatprep.subr.bf16.mxu0 0
          %1419 = vmatpush1.bf16.msra.mxu0 0
          %1420 = vmatprep.subr.bf16.mxu0 0
          %1421 = vmatpush1.bf16.msra.mxu0 0
          %1422 = vmatprep.subr.bf16.mxu0 0
          %1423 = vmatpush1.bf16.msra.mxu0 0
          %1424 = vmatprep.subr.bf16.mxu0 0
          %1425 = vmatpush1.bf16.msra.mxu0 0
          %1426 = vmatprep.subr.bf16.mxu0 0
          %1427 = vmatpush1.bf16.msra.mxu0 0
          %1428 = vmatprep.subr.bf16.mxu0 0
          %1429 = vmatpush1.bf16.msra.mxu0 0
          %1430 = vmatprep.subr.bf16.mxu0 0
          %1431 = vmatpush1.bf16.msra.mxu0 0
          %1432 = vmatprep.subr.bf16.mxu0 0
          %1433 = vmatpush1.bf16.msra.mxu0 0
          %1434 = vmatprep.subr.bf16.mxu0 0
          %1435 = vmatpush1.bf16.msra.mxu0 0
          %1436 = vmatprep.subr.bf16.mxu0 0
          %1437 = vmatpush1.bf16.msra.mxu0 0
          %1438 = vmatprep.subr.bf16.mxu0 0
          %1439 = vmatpush1.bf16.msra.mxu0 0
          %1440 = vmatprep.subr.bf16.mxu0 0
          %1441 = vmatpush1.bf16.msra.mxu0 0
          %1442 = vmatprep.subr.bf16.mxu0 0
          %1443 = vmatpush1.bf16.msra.mxu0 0
          %1444 = vmatprep.mubr.bf16.mxu0 0
          %1445 = vmatmul.mubr.bf16.gmra.mrb[0].mxu0 %v1407
          %v1446 = vpop.f32.mrb[0].mxu0
          %v1447 = vadd.f32 0.0, %v1446
          %v1448 = vpop.f32.mrb[0].mxu0
          %v1449 = vpop.f32.mrb[0].mxu0
          %v1450 = vpop.f32.mrb[0].mxu0
          %1451 = vdwg.mxu0
          %v1452 = vadd.f32 %v1400, %v1447
          %v1453 = vrcp.pop %v1404
          %v1454 = vmul.f32 %v1452, %v1453
          %v1455 = vpack.c.bf16 %v1454, %v1454
          %v1456 = vld [vmem:[#allocation4] sm:$0xff]
          %s1457 = smul.addr %s1082, 4
          %s1458 = scalar_lea.vmem [#allocation17], %s1457
          %v1459 = vld [vmem:[%s1458] sm:$0xf]
          %v1461 = vsel %vm1075, %v1455, 0
          %v1464 = vsel %vm1152, %v1459, 0
          %1466 = vmatprep.subr.bf16.mxu0 0
          %1467 = vmatpush1.bf16.msra.mxu0 %v1464
          %1468 = vmatprep.subr.bf16.mxu0 0
          %1469 = vmatpush1.bf16.msra.mxu0 0
          %1470 = vmatprep.subr.bf16.mxu0 0
          %1471 = vmatpush1.bf16.msra.mxu0 0
          %1472 = vmatprep.subr.bf16.mxu0 0
          %1473 = vmatpush1.bf16.msra.mxu0 0
          %1474 = vmatprep.subr.bf16.mxu0 0
          %1475 = vmatpush1.bf16.msra.mxu0 0
          %1476 = vmatprep.subr.bf16.mxu0 0
          %1477 = vmatpush1.bf16.msra.mxu0 0
          %1478 = vmatprep.subr.bf16.mxu0 0
          %1479 = vmatpush1.bf16.msra.mxu0 0
          %1480 = vmatprep.subr.bf16.mxu0 0
          %1481 = vmatpush1.bf16.msra.mxu0 0
          %1482 = vmatprep.subr.bf16.mxu0 0
          %1483 = vmatpush1.bf16.msra.mxu0 0
          %1484 = vmatprep.subr.bf16.mxu0 0
          %1485 = vmatpush1.bf16.msra.mxu0 0
          %1486 = vmatprep.subr.bf16.mxu0 0
          %1487 = vmatpush1.bf16.msra.mxu0 0
          %1488 = vmatprep.subr.bf16.mxu0 0
          %1489 = vmatpush1.bf16.msra.mxu0 0
          %1490 = vmatprep.subr.bf16.mxu0 0
          %1491 = vmatpush1.bf16.msra.mxu0 0
          %1492 = vmatprep.subr.bf16.mxu0 0
          %1493 = vmatpush1.bf16.msra.mxu0 0
          %1494 = vmatprep.subr.bf16.mxu0 0
          %1495 = vmatpush1.bf16.msra.mxu0 0
          %1496 = vmatprep.subr.bf16.mxu0 0
          %1497 = vmatpush1.bf16.msra.mxu0 0
          %1498 = vmatprep.mubr.bf16.mxu0 0
          %1499 = vmatmul.mubr.bf16.gmra.mrb[0].mxu0 %v1461
          %v1500 = vpop.f32.mrb[0].mxu0
          %v1501 = vadd.f32 0.0, %v1500
          %v1502 = vpop.f32.mrb[0].mxu0
          %v1503 = vpop.f32.mrb[0].mxu0
          %v1504 = vpop.f32.mrb[0].mxu0
          %1505 = vdwg.mxu0
          %v1506 = vadd.f32 %v1456, %v1501
          %1507 = vst.msk [vmem:[#allocation4] sm:$0xff] %vm992, %v1506
          %v1508 = vld [vmem:[#allocation5] sm:$0xff]
          %s1509 = smul.addr %s1082, 4
          %s1510 = scalar_lea.vmem [#allocation24], %s1509
          %v1511 = vld [vmem:[%s1510] sm:$0xf]
          %v1513 = vsel %vm1152, %v1511, 0
          %1515 = vmatprep.subr.bf16.mxu0 0
          %1516 = vmatpush1.bf16.msra.mxu0 %v1513
          %1517 = vmatprep.subr.bf16.mxu0 0
          %1518 = vmatpush1.bf16.msra.mxu0 0
          %1519 = vmatprep.subr.bf16.mxu0 0
          %1520 = vmatpush1.bf16.msra.mxu0 0
          %1521 = vmatprep.subr.bf16.mxu0 0
          %1522 = vmatpush1.bf16.msra.mxu0 0
          %1523 = vmatprep.subr.bf16.mxu0 0
          %1524 = vmatpush1.bf16.msra.mxu0 0
          %1525 = vmatprep.subr.bf16.mxu0 0
          %1526 = vmatpush1.bf16.msra.mxu0 0
          %1527 = vmatprep.subr.bf16.mxu0 0
          %1528 = vmatpush1.bf16.msra.mxu0 0
          %1529 = vmatprep.subr.bf16.mxu0 0
          %1530 = vmatpush1.bf16.msra.mxu0 0
          %1531 = vmatprep.subr.bf16.mxu0 0
          %1532 = vmatpush1.bf16.msra.mxu0 0
          %1533 = vmatprep.subr.bf16.mxu0 0
          %1534 = vmatpush1.bf16.msra.mxu0 0
          %1535 = vmatprep.subr.bf16.mxu0 0
          %1536 = vmatpush1.bf16.msra.mxu0 0
          %1537 = vmatprep.subr.bf16.mxu0 0
          %1538 = vmatpush1.bf16.msra.mxu0 0
          %1539 = vmatprep.subr.bf16.mxu0 0
          %1540 = vmatpush1.bf16.msra.mxu0 0
          %1541 = vmatprep.subr.bf16.mxu0 0
          %1542 = vmatpush1.bf16.msra.mxu0 0
          %1543 = vmatprep.subr.bf16.mxu0 0
          %1544 = vmatpush1.bf16.msra.mxu0 0
          %1545 = vmatprep.subr.bf16.mxu0 0
          %1546 = vmatpush1.bf16.msra.mxu0 0
          %1547 = vmatprep.mubr.bf16.mxu0 0
          %1548 = vmatmul.mubr.bf16.gmra.mrb[0].mxu0 %v1461
          %v1549 = vpop.f32.mrb[0].mxu0
          %v1550 = vadd.f32 0.0, %v1549
          %v1551 = vpop.f32.mrb[0].mxu0
          %v1552 = vpop.f32.mrb[0].mxu0
          %v1553 = vpop.f32.mrb[0].mxu0
          %1554 = vdwg.mxu0
          %v1555 = vadd.f32 %v1508, %v1550
          %1556 = vst.msk [vmem:[#allocation5] sm:$0xff] %vm1075, %v1555
        $region185: #{tpu_custom_call.1} parent=99 // loop_footer
          %s1086 = sadd.s32 1, %s1082
        $region186: #{tpu_custom_call.1} parent=99 // loop_footer_branch
          %1081 = sbr.rel target = $region182
        $region187: #{tpu_custom_call.1} parent=99 // loop_exit
          _
        %v1557 = vld [vmem:[#allocation5] sm:$0xff]
        %v1558 = vpack.c.bf16 %v1557, %v1557
        %v1559 = vld [vmem:[#allocation26] sm:$0xf]
        %v1561 = vsel %vm1075, %v1558, 0
        %vm1563 = vcmask 1043456
        %v1565 = vsel %vm1563, %v1559, 0
        %1567 = vmatprep.subr.bf16.mxu0 0
        %1568 = vmatpush1.bf16.msra.mxu0 %v1565
        %1569 = vmatprep.subr.bf16.mxu0 0
        %1570 = vmatpush1.bf16.msra.mxu0 0
        %1571 = vmatprep.subr.bf16.mxu0 0
        %1572 = vmatpush1.bf16.msra.mxu0 0
        %1573 = vmatprep.subr.bf16.mxu0 0
        %1574 = vmatpush1.bf16.msra.mxu0 0
        %1575 = vmatprep.subr.bf16.mxu0 0
        %1576 = vmatpush1.bf16.msra.mxu0 0
        %1577 = vmatprep.subr.bf16.mxu0 0
        %1578 = vmatpush1.bf16.msra.mxu0 0
        %1579 = vmatprep.subr.bf16.mxu0 0
        %1580 = vmatpush1.bf16.msra.mxu0 0
        %1581 = vmatprep.subr.bf16.mxu0 0
        %1582 = vmatpush1.bf16.msra.mxu0 0
        %1583 = vmatprep.subr.bf16.mxu0 0
        %1584 = vmatpush1.bf16.msra.mxu0 0
        %1585 = vmatprep.subr.bf16.mxu0 0
        %1586 = vmatpush1.bf16.msra.mxu0 0
        %1587 = vmatprep.subr.bf16.mxu0 0
        %1588 = vmatpush1.bf16.msra.mxu0 0
        %1589 = vmatprep.subr.bf16.mxu0 0
        %1590 = vmatpush1.bf16.msra.mxu0 0
        %1591 = vmatprep.subr.bf16.mxu0 0
        %1592 = vmatpush1.bf16.msra.mxu0 0
        %1593 = vmatprep.subr.bf16.mxu0 0
        %1594 = vmatpush1.bf16.msra.mxu0 0
        %1595 = vmatprep.subr.bf16.mxu0 0
        %1596 = vmatpush1.bf16.msra.mxu0 0
        %1597 = vmatprep.subr.bf16.mxu0 0
        %1598 = vmatpush1.bf16.msra.mxu0 0
        %1599 = vmatprep.mubr.bf16.mxu0 0
        %1600 = vmatmul.mubr.bf16.gmra.mrb[0].mxu0 %v1561
        %v1601 = vpop.f32.mrb[0].mxu0
        %v1602 = vadd.f32 0.0, %v1601
        %v1603 = vpop.f32.mrb[0].mxu0
        %v1604 = vpop.f32.mrb[0].mxu0
        %v1605 = vpop.f32.mrb[0].mxu0
        %1606 = vdwg.mxu0
        %v1607 = vld [vmem:[#allocation4] sm:$0xff]
        %v1608 = vsel %vm989, %v1602, %v1607
        %v1609 = vadd.f32 %v980, %v1608
        %v1610 = vld [vmem:[#allocation14 + $0x3] sm:$0x1]
        %v1611 = vmul.f32 %v1609, %v1609
        %v1612 = vsel %vm992, %v1611, 0.0
        %1613 = vadd.xlane.f32.xlu0 %v1612
        %v1614 = vpop.xlane.xlu0 %1613
        %v1615 = vmul.f32 %v1614, %v996
        %v1616 = vadd.f32 %v1615, 1e-06
        %v1617 = vrsqrt.pop %v1616
        %v1618 = vmul.f32 %v1609, %v1617
        %v1619 = vlaneseq
        %v1620 = vshrl.u32 %v1619, 7
        %v1621 = vsub.s32 0, %v1620
        %v1622 = vrot.slane %v1610, %v1621
        %v1623 = vmul.f32 %v1618, %v1622
        %v1624 = vld [vmem:[#allocation14 + $0x2] sm:$0x1]
        %v1625 = vlaneseq
        %v1626 = vshrl.u32 %v1625, 7
        %v1627 = vsub.s32 0, %v1626
        %v1628 = vrot.slane %v1624, %v1627
        %v1629 = vmul.f32 %v1618, %v1628
        %v1630 = vsel %vm989, %v1623, %v1629
        %v1631 = vpack.c.bf16 %v1630, %v1630
        %v1632 = vld [vmem:[#allocation27] sm:$0xf]
        %v1633 = vld [vmem:[#allocation27 + $0x4] sm:$0xf]
        %v1634 = vld [vmem:[#allocation27 + $0x8] sm:$0xf]
        %v1635 = vld [vmem:[#allocation27 + $0xc] sm:$0xf]
        %v1640 = vunpack.c.l.b16 %v1632
        %v1641 = vunpack.c.l.b16 %v1633
        %v1642 = vunpack.c.l.b16 %v1634
        %v1643 = vunpack.c.l.b16 %v1635
        %v1644 = vpack.c.b16 %v1641, %v1640
        %v1645 = vpack.c.b16 %v1643, %v1642
        %v1649 = vsel %vm992, %v1631, 0
        %1651 = vmatprep.subr.bf16.mxu0 0
        %1652 = vmatpush1.bf16.msra.mxu0 %v1644
        %1653 = vmatprep.subr.bf16.mxu0 0
        %1654 = vmatpush1.bf16.msra.mxu0 %v1645
        %1655 = vmatprep.subr.bf16.mxu0 0
        %1656 = vmatpush1.bf16.msra.mxu0 0
        %1657 = vmatprep.subr.bf16.mxu0 0
        %1658 = vmatpush1.bf16.msra.mxu0 0
        %1659 = vmatprep.subr.bf16.mxu0 0
        %1660 = vmatpush1.bf16.msra.mxu0 0
        %1661 = vmatprep.subr.bf16.mxu0 0
        %1662 = vmatpush1.bf16.msra.mxu0 0
        %1663 = vmatprep.subr.bf16.mxu0 0
        %1664 = vmatpush1.bf16.msra.mxu0 0
        %1665 = vmatprep.subr.bf16.mxu0 0
        %1666 = vmatpush1.bf16.msra.mxu0 0
        %1667 = vmatprep.subr.bf16.mxu0 0
        %1668 = vmatpush1.bf16.msra.mxu0 0
        %1669 = vmatprep.subr.bf16.mxu0 0
        %1670 = vmatpush1.bf16.msra.mxu0 0
        %1671 = vmatprep.subr.bf16.mxu0 0
        %1672 = vmatpush1.bf16.msra.mxu0 0
        %1673 = vmatprep.subr.bf16.mxu0 0
        %1674 = vmatpush1.bf16.msra.mxu0 0
        %1675 = vmatprep.subr.bf16.mxu0 0
        %1676 = vmatpush1.bf16.msra.mxu0 0
        %1677 = vmatprep.subr.bf16.mxu0 0
        %1678 = vmatpush1.bf16.msra.mxu0 0
        %1679 = vmatprep.subr.bf16.mxu0 0
        %1680 = vmatpush1.bf16.msra.mxu0 0
        %1681 = vmatprep.subr.bf16.mxu0 0
        %1682 = vmatpush1.bf16.msra.mxu0 0
        %1683 = vmatprep.mubr.bf16.mxu0 0
        %1684 = vmatmul.mubr.bf16.gmra.mrb[0].mxu0 %v1649
        %v1685 = vpop.f32.mrb[0].mxu0
        %v1686 = vadd.f32 0.0, %v1685
        %v1687 = vpop.f32.mrb[0].mxu0
        %v1688 = vpop.f32.mrb[0].mxu0
        %v1689 = vpop.f32.mrb[0].mxu0
        %1690 = vdwg.mxu0
        %v1691 = vxor.u32 %v1686, 2147483648
        %v1692 = vmul.f32 %v1691, 1.442695
        %v1693 = vpow.pop %v1692
        %v1694 = vadd.f32 %v1693, 1.0
        %v1695 = vrcp.pop %v1694
        %v1696 = vmul.f32 1.0, %v1695
        %v1697 = vmul.f32 %v1686, %v1696
        %1699 = vrot.lane.b32.xlu0 %v1686, 64
        %v1700 = vpop.permute.xlu0 %1699
        %v1702 = vmul.f32 %v1697, %v1700
        %v1703 = vpack.c.bf16 %v1702, %v1702
        %v1704 = vld [vmem:[#allocation29] sm:$0xf]
        %v1705 = vld [vmem:[#allocation29 + $0x4] sm:$0xf]
        %v1706 = vld [vmem:[#allocation29 + $0x8] sm:$0xf]
        %v1707 = vld [vmem:[#allocation29 + $0xc] sm:$0xf]
        %v1708 = vld [vmem:[#allocation29 + $0x10] sm:$0xf]
        %v1709 = vld [vmem:[#allocation29 + $0x14] sm:$0xf]
        %v1710 = vld [vmem:[#allocation29 + $0x18] sm:$0xf]
        %v1711 = vld [vmem:[#allocation29 + $0x1c] sm:$0xf]
        %v1720 = vunpack.c.l.b16 %v1704
        %v1721 = vunpack.c.l.b16 %v1705
        %v1722 = vunpack.c.l.b16 %v1706
        %v1723 = vunpack.c.l.b16 %v1707
        %v1724 = vunpack.c.l.b16 %v1708
        %v1725 = vunpack.c.l.b16 %v1709
        %v1726 = vunpack.c.l.b16 %v1710
        %v1727 = vunpack.c.l.b16 %v1711
        %v1728 = vpack.c.b16 %v1721, %v1720
        %v1729 = vpack.c.b16 %v1723, %v1722
        %v1730 = vpack.c.b16 %v1725, %v1724
        %v1731 = vpack.c.b16 %v1727, %v1726
        %vm1736 = vcmask 523264
        %v1738 = vsel %vm1736, %v1703, 0
        %1740 = vmatprep.subr.bf16.mxu0 0
        %1741 = vmatpush1.bf16.msra.mxu0 %v1728
        %1742 = vmatprep.subr.bf16.mxu0 0
        %1743 = vmatpush1.bf16.msra.mxu0 %v1729
        %1744 = vmatprep.subr.bf16.mxu0 0
        %1745 = vmatpush1.bf16.msra.mxu0 %v1730
        %1746 = vmatprep.subr.bf16.mxu0 0
        %1747 = vmatpush1.bf16.msra.mxu0 %v1731
        %1748 = vmatprep.subr.bf16.mxu0 0
        %1749 = vmatpush1.bf16.msra.mxu0 0
        %1750 = vmatprep.subr.bf16.mxu0 0
        %1751 = vmatpush1.bf16.msra.mxu0 0
        %1752 = vmatprep.subr.bf16.mxu0 0
        %1753 = vmatpush1.bf16.msra.mxu0 0
        %1754 = vmatprep.subr.bf16.mxu0 0
        %1755 = vmatpush1.bf16.msra.mxu0 0
        %1756 = vmatprep.subr.bf16.mxu0 0
        %1757 = vmatpush1.bf16.msra.mxu0 0
        %1758 = vmatprep.subr.bf16.mxu0 0
        %1759 = vmatpush1.bf16.msra.mxu0 0
        %1760 = vmatprep.subr.bf16.mxu0 0
        %1761 = vmatpush1.bf16.msra.mxu0 0
        %1762 = vmatprep.subr.bf16.mxu0 0
        %1763 = vmatpush1.bf16.msra.mxu0 0
        %1764 = vmatprep.subr.bf16.mxu0 0
        %1765 = vmatpush1.bf16.msra.mxu0 0
        %1766 = vmatprep.subr.bf16.mxu0 0
        %1767 = vmatpush1.bf16.msra.mxu0 0
        %1768 = vmatprep.subr.bf16.mxu0 0
        %1769 = vmatpush1.bf16.msra.mxu0 0
        %1770 = vmatprep.subr.bf16.mxu0 0
        %1771 = vmatpush1.bf16.msra.mxu0 0
        %1772 = vmatprep.mubr.bf16.mxu0 0
        %1773 = vmatmul.mubr.bf16.gmra.mrb[0].mxu0 %v1738
        %v1774 = vpop.f32.mrb[0].mxu0
        %v1775 = vadd.f32 0.0, %v1774
        %v1776 = vpop.f32.mrb[0].mxu0
        %v1777 = vpop.f32.mrb[0].mxu0
        %v1778 = vpop.f32.mrb[0].mxu0
        %1779 = vdwg.mxu0
        %v1780 = vld [vmem:[#allocation30] sm:$0xf]
        %v1781 = vld [vmem:[#allocation30 + $0x4] sm:$0xf]
        %v1782 = vld [vmem:[#allocation30 + $0x8] sm:$0xf]
        %v1783 = vld [vmem:[#allocation30 + $0xc] sm:$0xf]
        %v1788 = vunpack.c.l.b16 %v1780
        %v1789 = vunpack.c.l.b16 %v1781
        %v1790 = vunpack.c.l.b16 %v1782
        %v1791 = vunpack.c.l.b16 %v1783
        %v1792 = vpack.c.b16 %v1789, %v1788
        %v1793 = vpack.c.b16 %v1791, %v1790
        %1796 = vmatprep.subr.bf16.mxu0 0
        %1797 = vmatpush1.bf16.msra.mxu0 %v1792
        %1798 = vmatprep.subr.bf16.mxu0 0
        %1799 = vmatpush1.bf16.msra.mxu0 %v1793
        %1800 = vmatprep.subr.bf16.mxu0 0
        %1801 = vmatpush1.bf16.msra.mxu0 0
        %1802 = vmatprep.subr.bf16.mxu0 0
        %1803 = vmatpush1.bf16.msra.mxu0 0
        %1804 = vmatprep.subr.bf16.mxu0 0
        %1805 = vmatpush1.bf16.msra.mxu0 0
        %1806 = vmatprep.subr.bf16.mxu0 0
        %1807 = vmatpush1.bf16.msra.mxu0 0
        %1808 = vmatprep.subr.bf16.mxu0 0
        %1809 = vmatpush1.bf16.msra.mxu0 0
        %1810 = vmatprep.subr.bf16.mxu0 0
        %1811 = vmatpush1.bf16.msra.mxu0 0
        %1812 = vmatprep.subr.bf16.mxu0 0
        %1813 = vmatpush1.bf16.msra.mxu0 0
        %1814 = vmatprep.subr.bf16.mxu0 0
        %1815 = vmatpush1.bf16.msra.mxu0 0
        %1816 = vmatprep.subr.bf16.mxu0 0
        %1817 = vmatpush1.bf16.msra.mxu0 0
        %1818 = vmatprep.subr.bf16.mxu0 0
        %1819 = vmatpush1.bf16.msra.mxu0 0
        %1820 = vmatprep.subr.bf16.mxu0 0
        %1821 = vmatpush1.bf16.msra.mxu0 0
        %1822 = vmatprep.subr.bf16.mxu0 0
        %1823 = vmatpush1.bf16.msra.mxu0 0
        %1824 = vmatprep.subr.bf16.mxu0 0
        %1825 = vmatpush1.bf16.msra.mxu0 0
        %1826 = vmatprep.subr.bf16.mxu0 0
        %1827 = vmatpush1.bf16.msra.mxu0 0
        %1828 = vmatprep.mubr.bf16.mxu0 0
        %1829 = vmatmul.mubr.bf16.gmra.mrb[0].mxu0 %v1649
        %v1830 = vpop.f32.mrb[0].mxu0
        %v1831 = vadd.f32 0.0, %v1830
        %v1832 = vpop.f32.mrb[0].mxu0
        %v1833 = vpop.f32.mrb[0].mxu0
        %v1834 = vpop.f32.mrb[0].mxu0
        %1835 = vdwg.mxu0
        %v1836 = vpack.c.bf16 %v1831, %v1831
        %v1837 = vld [vmem:[#allocation32] sm:$0xf]
        %v1838 = vld [vmem:[#allocation32 + $0x4] sm:$0xf]
        %v1841 = vunpack.c.l.b16 %v1837
        %v1842 = vunpack.c.l.b16 %v1838
        %v1843 = vpack.c.b16 %v1842, %v1841
        %vm1845 = vcmask 130048
        %v1847 = vsel %vm1845, %v1836, 0
        %1849 = vmatprep.subr.bf16.mxu0 0
        %1850 = vmatpush1.bf16.msra.mxu0 %v1843
        %1851 = vmatprep.subr.bf16.mxu0 0
        %1852 = vmatpush1.bf16.msra.mxu0 0
        %1853 = vmatprep.subr.bf16.mxu0 0
        %1854 = vmatpush1.bf16.msra.mxu0 0
        %1855 = vmatprep.subr.bf16.mxu0 0
        %1856 = vmatpush1.bf16.msra.mxu0 0
        %1857 = vmatprep.subr.bf16.mxu0 0
        %1858 = vmatpush1.bf16.msra.mxu0 0
        %1859 = vmatprep.subr.bf16.mxu0 0
        %1860 = vmatpush1.bf16.msra.mxu0 0
        %1861 = vmatprep.subr.bf16.mxu0 0
        %1862 = vmatpush1.bf16.msra.mxu0 0
        %1863 = vmatprep.subr.bf16.mxu0 0
        %1864 = vmatpush1.bf16.msra.mxu0 0
        %1865 = vmatprep.subr.bf16.mxu0 0
        %1866 = vmatpush1.bf16.msra.mxu0 0
        %1867 = vmatprep.subr.bf16.mxu0 0
        %1868 = vmatpush1.bf16.msra.mxu0 0
        %1869 = vmatprep.subr.bf16.mxu0 0
        %1870 = vmatpush1.bf16.msra.mxu0 0
        %1871 = vmatprep.subr.bf16.mxu0 0
        %1872 = vmatpush1.bf16.msra.mxu0 0
        %1873 = vmatprep.subr.bf16.mxu0 0
        %1874 = vmatpush1.bf16.msra.mxu0 0
        %1875 = vmatprep.subr.bf16.mxu0 0
        %1876 = vmatpush1.bf16.msra.mxu0 0
        %1877 = vmatprep.subr.bf16.mxu0 0
        %1878 = vmatpush1.bf16.msra.mxu0 0
        %1879 = vmatprep.subr.bf16.mxu0 0
        %1880 = vmatpush1.bf16.msra.mxu0 0
        %1881 = vmatprep.mubr.bf16.mxu0 0
        %1882 = vmatmul.mubr.bf16.gmra.mrb[0].mxu0 %v1847
        %v1883 = vpop.f32.mrb[0].mxu0
        %v1884 = vadd.f32 0.0, %v1883
        %v1885 = vpop.f32.mrb[0].mxu0
        %v1886 = vpop.f32.mrb[0].mxu0
        %v1887 = vpop.f32.mrb[0].mxu0
        %1888 = vdwg.mxu0
        %v1889 = vxor.u32 %v1884, 2147483648
        %v1890 = vmul.f32 %v1889, 1.442695
        %v1891 = vpow.pop %v1890
        %v1892 = vadd.f32 %v1891, 1.0
        %v1893 = vrcp.pop %v1892
        %v1894 = vmul.f32 1.0, %v1893
        %v1895 = vmul.f32 %v1884, %v1894
        %v1896 = vld [vmem:[#allocation33] sm:$0xf]
        %v1897 = vld [vmem:[#allocation33 + $0x4] sm:$0xf]
        %1899 = vrot.lane.b32.xlu0 %v1836, 112
        %v1900 = vpop.permute.xlu0 %1899
        %v1903 = vunpack.c.l.b16 %v1896
        %v1904 = vunpack.c.l.b16 %v1897
        %v1905 = vpack.c.b16 %v1904, %v1903
        %v1908 = vsel %vm1845, %v1900, 0
        %1910 = vmatprep.subr.bf16.mxu0 0
        %1911 = vmatpush1.bf16.msra.mxu0 %v1905
        %1912 = vmatprep.subr.bf16.mxu0 0
        %1913 = vmatpush1.bf16.msra.mxu0 0
        %1914 = vmatprep.subr.bf16.mxu0 0
        %1915 = vmatpush1.bf16.msra.mxu0 0
        %1916 = vmatprep.subr.bf16.mxu0 0
        %1917 = vmatpush1.bf16.msra.mxu0 0
        %1918 = vmatprep.subr.bf16.mxu0 0
        %1919 = vmatpush1.bf16.msra.mxu0 0
        %1920 = vmatprep.subr.bf16.mxu0 0
        %1921 = vmatpush1.bf16.msra.mxu0 0
        %1922 = vmatprep.subr.bf16.mxu0 0
        %1923 = vmatpush1.bf16.msra.mxu0 0
        %1924 = vmatprep.subr.bf16.mxu0 0
        %1925 = vmatpush1.bf16.msra.mxu0 0
        %1926 = vmatprep.subr.bf16.mxu0 0
        %1927 = vmatpush1.bf16.msra.mxu0 0
        %1928 = vmatprep.subr.bf16.mxu0 0
        %1929 = vmatpush1.bf16.msra.mxu0 0
        %1930 = vmatprep.subr.bf16.mxu0 0
        %1931 = vmatpush1.bf16.msra.mxu0 0
        %1932 = vmatprep.subr.bf16.mxu0 0
        %1933 = vmatpush1.bf16.msra.mxu0 0
        %1934 = vmatprep.subr.bf16.mxu0 0
        %1935 = vmatpush1.bf16.msra.mxu0 0
        %1936 = vmatprep.subr.bf16.mxu0 0
        %1937 = vmatpush1.bf16.msra.mxu0 0
        %1938 = vmatprep.subr.bf16.mxu0 0
        %1939 = vmatpush1.bf16.msra.mxu0 0
        %1940 = vmatprep.subr.bf16.mxu0 0
        %1941 = vmatpush1.bf16.msra.mxu0 0
        %1942 = vmatprep.mubr.bf16.mxu0 0
        %1943 = vmatmul.mubr.bf16.gmra.mrb[0].mxu0 %v1908
        %v1944 = vpop.f32.mrb[0].mxu0
        %v1945 = vadd.f32 0.0, %v1944
        %v1946 = vpop.f32.mrb[0].mxu0
        %v1947 = vpop.f32.mrb[0].mxu0
        %v1948 = vpop.f32.mrb[0].mxu0
        %1949 = vdwg.mxu0
        %v1950 = vmul.f32 %v1895, %v1945
        %v1951 = vpack.c.bf16 %v1950, %v1950
        %v1952 = vld [vmem:[#allocation35] sm:$0xf]
        %v1953 = vld [vmem:[#allocation35 + $0x4] sm:$0xf]
        %v1954 = vld [vmem:[#allocation35 + $0x8] sm:$0xf]
        %v1955 = vld [vmem:[#allocation35 + $0xc] sm:$0xf]
        %v1956 = vld [vmem:[#allocation35 + $0x10] sm:$0xf]
        %v1957 = vld [vmem:[#allocation35 + $0x14] sm:$0xf]
        %v1958 = vld [vmem:[#allocation35 + $0x18] sm:$0xf]
        %v1959 = vld [vmem:[#allocation35 + $0x1c] sm:$0xf]
        %v1968 = vunpack.c.l.b16 %v1952
        %v1969 = vunpack.c.l.b16 %v1953
        %v1970 = vunpack.c.l.b16 %v1954
        %v1971 = vunpack.c.l.b16 %v1955
        %v1972 = vunpack.c.l.b16 %v1956
        %v1973 = vunpack.c.l.b16 %v1957
        %v1974 = vunpack.c.l.b16 %v1958
        %v1975 = vunpack.c.l.b16 %v1959
        %v1976 = vpack.c.b16 %v1969, %v1968
        %v1977 = vpack.c.b16 %v1971, %v1970
        %v1978 = vpack.c.b16 %v1973, %v1972
        %v1979 = vpack.c.b16 %v1975, %v1974
        %v1985 = vsel %vm1736, %v1951, 0
        %1987 = vmatprep.subr.bf16.mxu0 0
        %1988 = vmatpush1.bf16.msra.mxu0 %v1976
        %1989 = vmatprep.subr.bf16.mxu0 0
        %1990 = vmatpush1.bf16.msra.mxu0 %v1977
        %1991 = vmatprep.subr.bf16.mxu0 0
        %1992 = vmatpush1.bf16.msra.mxu0 %v1978
        %1993 = vmatprep.subr.bf16.mxu0 0
        %1994 = vmatpush1.bf16.msra.mxu0 %v1979
        %1995 = vmatprep.subr.bf16.mxu0 0
        %1996 = vmatpush1.bf16.msra.mxu0 0
        %1997 = vmatprep.subr.bf16.mxu0 0
        %1998 = vmatpush1.bf16.msra.mxu0 0
        %1999 = vmatprep.subr.bf16.mxu0 0
        %2000 = vmatpush1.bf16.msra.mxu0 0
        %2001 = vmatprep.subr.bf16.mxu0 0
        %2002 = vmatpush1.bf16.msra.mxu0 0
        %2003 = vmatprep.subr.bf16.mxu0 0
        %2004 = vmatpush1.bf16.msra.mxu0 0
        %2005 = vmatprep.subr.bf16.mxu0 0
        %2006 = vmatpush1.bf16.msra.mxu0 0
        %2007 = vmatprep.subr.bf16.mxu0 0
        %2008 = vmatpush1.bf16.msra.mxu0 0
        %2009 = vmatprep.subr.bf16.mxu0 0
        %2010 = vmatpush1.bf16.msra.mxu0 0
        %2011 = vmatprep.subr.bf16.mxu0 0
        %2012 = vmatpush1.bf16.msra.mxu0 0
        %2013 = vmatprep.subr.bf16.mxu0 0
        %2014 = vmatpush1.bf16.msra.mxu0 0
        %2015 = vmatprep.subr.bf16.mxu0 0
        %2016 = vmatpush1.bf16.msra.mxu0 0
        %2017 = vmatprep.subr.bf16.mxu0 0
        %2018 = vmatpush1.bf16.msra.mxu0 0
        %2019 = vmatprep.mubr.bf16.mxu0 0
        %2020 = vmatmul.mubr.bf16.gmra.mrb[0].mxu0 %v1985
        %v2021 = vpop.f32.mrb[0].mxu0
        %v2022 = vadd.f32 0.0, %v2021
        %v2023 = vpop.f32.mrb[0].mxu0
        %v2024 = vpop.f32.mrb[0].mxu0
        %v2025 = vpop.f32.mrb[0].mxu0
        %2026 = vdwg.mxu0
        %v2027 = vpack.c.bf16 %v2022, %v2022
        %v2028 = vld [vmem:[#allocation36] sm:$0xf]
        %v2030 = vsel %vm1075, %v2027, 0
        %v2033 = vsel %vm1563, %v2028, 0
        %2035 = vmatprep.subr.bf16.mxu0 0
        %2036 = vmatpush1.bf16.msra.mxu0 %v2033
        %2037 = vmatprep.subr.bf16.mxu0 0
        %2038 = vmatpush1.bf16.msra.mxu0 0
        %2039 = vmatprep.subr.bf16.mxu0 0
        %2040 = vmatpush1.bf16.msra.mxu0 0
        %2041 = vmatprep.subr.bf16.mxu0 0
        %2042 = vmatpush1.bf16.msra.mxu0 0
        %2043 = vmatprep.subr.bf16.mxu0 0
        %2044 = vmatpush1.bf16.msra.mxu0 0
        %2045 = vmatprep.subr.bf16.mxu0 0
        %2046 = vmatpush1.bf16.msra.mxu0 0
        %2047 = vmatprep.subr.bf16.mxu0 0
        %2048 = vmatpush1.bf16.msra.mxu0 0
        %2049 = vmatprep.subr.bf16.mxu0 0
        %2050 = vmatpush1.bf16.msra.mxu0 0
        %2051 = vmatprep.subr.bf16.mxu0 0
        %2052 = vmatpush1.bf16.msra.mxu0 0
        %2053 = vmatprep.subr.bf16.mxu0 0
        %2054 = vmatpush1.bf16.msra.mxu0 0
        %2055 = vmatprep.subr.bf16.mxu0 0
        %2056 = vmatpush1.bf16.msra.mxu0 0
        %2057 = vmatprep.subr.bf16.mxu0 0
        %2058 = vmatpush1.bf16.msra.mxu0 0
        %2059 = vmatprep.subr.bf16.mxu0 0
        %2060 = vmatpush1.bf16.msra.mxu0 0
        %2061 = vmatprep.subr.bf16.mxu0 0
        %2062 = vmatpush1.bf16.msra.mxu0 0
        %2063 = vmatprep.subr.bf16.mxu0 0
        %2064 = vmatpush1.bf16.msra.mxu0 0
        %2065 = vmatprep.subr.bf16.mxu0 0
        %2066 = vmatpush1.bf16.msra.mxu0 0
        %2067 = vmatprep.mubr.bf16.mxu0 0
        %2068 = vmatmul.mubr.bf16.gmra.mrb[0].mxu0 %v2030
        %v2069 = vpop.f32.mrb[0].mxu0
        %v2070 = vadd.f32 0.0, %v2069
        %v2071 = vpop.f32.mrb[0].mxu0
        %v2072 = vpop.f32.mrb[0].mxu0
        %v2073 = vpop.f32.mrb[0].mxu0
        %2074 = vdwg.mxu0
        %v2075 = vsel %vm989, %v2070, %v1775
        %v2076 = vadd.f32 %v1609, %v2075
        %2077 = vst.msk [vmem:[%s978] sm:$0xff] %vm992, %v2076
        %s2078 = sand.u32 %s499, 1
        %s2079 = scalar_lea.sflag [#allocation8], %s2078
        %s2080 = sand.u32 %s499, 1
        %s2081 = smul.addr %s2080, 8
        %s2082 = scalar_lea.vmem [#allocation38], %s2081
        // Predicated region
        $region188: #{tpu_custom_call.1} parent=99 // pred_check
          %p2083 = pneg %p509
        $region189: #{tpu_custom_call.1} parent=99 // pred_check_branch
          %2085 = sbr.rel (%p2083) target = $region191
        $region190: #{tpu_custom_call.1} parent=99 // pred_region
          %s2087 = ssub.s32 128, 128
          %2088 = vsyncadd %s2079, %s2087
          %s2089 = smul.addr %s51, 128
          %s2090 = scalar_lea.hbm %s20, %s2089
          %s2092 = sshll.u32 %s2082, 4
          %s2093 = int_to_ptr.vmem [resolvable:$true] %s2092
          %2095 = dma.vmem_to_hbm [thread:$0]  %s2093, 128, %s2090, %s2079
        $region191: #{tpu_custom_call.1} parent=99 // pred_fallthru
          _
      $region100: #{tpu_custom_call.1} parent=5 // pred_fallthru
        _
      %p2096 = scmp.le.s32.totalorder 2, %s46
      // Predicated region
      $region192: #{tpu_custom_call.1} parent=5 // pred_check
        %p2097 = pneg %p2096
      $region193: #{tpu_custom_call.1} parent=5 // pred_check_branch
        %2099 = sbr.rel (%p2097) target = $region195
      $region194: #{tpu_custom_call.1} parent=5 // pred_region
        %s2100 = ssub.s32 %s46, 2
        // Predicated region
        $region196: #{tpu_custom_call.1} parent=194 // pred_check
          %p2101 = pneg %p515
        $region197: #{tpu_custom_call.1} parent=194 // pred_check_branch
          %2103 = sbr.rel (%p2101) target = $region199
        $region198: #{tpu_custom_call.1} parent=194 // pred_region
          %s2104 = sand.u32 %s500, 1
          %s2105 = scalar_lea.sflag [#allocation8], %s2104
          %s2106 = sand.u32 %s500, 1
          %s2107 = smul.addr %s2106, 8
          %s2108 = scalar_lea.vmem [#allocation38], %s2107
          %2109 = dma.done %s2105, 128
        $region199: #{tpu_custom_call.1} parent=194 // pred_fallthru
          _
      $region195: #{tpu_custom_call.1} parent=5 // pred_fallthru
        _
    $region6: #{tpu_custom_call.1} parent=1 // loop_footer
      %s50 = sadd.s32 1, %s46
    $region7: #{tpu_custom_call.1} parent=1 // loop_footer_branch
      %45 = sbr.rel target = $region3
    $region8: #{tpu_custom_call.1} parent=1 // loop_exit
      _
    %2110 = vsyncpa [#allocation7], 1
    %s2111 = scalar_lea.sflag [#allocation7], 1
    %2112 = vsyncpa %s2111, 1
    %2113 = vsyncpa [#allocation10], 1
    %s2114 = scalar_lea.sflag [#allocation10], 1
    %2115 = vsyncpa %s2114, 1
    %2116 = vsyncpa [#allocation13], 1
    %s2117 = scalar_lea.sflag [#allocation13], 1
    %2118 = vsyncpa %s2117, 1
    %2119 = vsyncpa [#allocation16], 1
    %2120 = vsyncpa [#allocation19], 1
    %2121 = vsyncpa [#allocation22], 1
    %2122 = vsyncpa [#allocation25], 1
    %2123 = vsyncpa [#allocation28], 1
    %2124 = vsyncpa [#allocation31], 1
    %2125 = vsyncpa [#allocation34], 1
    %2126 = vsyncpa [#allocation37], 1
    %2127 = vsyncpa [#allocation8], 1
    %s2128 = scalar_lea.sflag [#allocation8], 1
    %2129 = vsyncpa %s2128, 1

</llo_original>
